<compile_context>
chip_gen: v7x
topology: tpu7x:2x2x1
jax: 0.10.0
libtpu: 0.0.40
codegen_flags: <defaults>
</compile_context>

<pallas_src>
import jax
import jax.numpy as jnp
from jax.experimental import pallas as pl
from jax.experimental.pallas import tpu as pltpu

FEATURE_SIZE = 128
RNN_HIDDEN = 64
RNN_LAYERS = 2          # hardcoded as two explicit LSTM layers in the kernel
OUTPUT_CLASSES = 2
LANES = 128             # TPU lane width; dense head is lane-padded to this


def _lstm_dense_kernel(x_ref,     # (T, B_blk, F)   time-major input block
                       wih0_ref,  # (F, 4H)         layer-0 input weight, gate order (i,f,o,g)
                       wbig_ref,  # (2H, 8H)        [[whh0, wih1], [0, whh1]]  (skewed fusion)
                       b0_ref,    # (1, 4H)         bih0 + bhh0
                       b1_ref,    # (1, 4H)         bih1 + bhh1
                       wd_ref,    # (H, 128)        dense weight, lane-padded
                       bd_ref,    # (1, 128)        dense bias, lane-padded
                       out_ref):  # (B_blk, 128)
    T, B, F = x_ref.shape
    H4 = wih0_ref.shape[1]
    H = H4 // 4
    wdt = wih0_ref.dtype     # f32 or bf16; matmuls accumulate in f32 either way

    # ---- Hoisted layer-0 input projection for all timesteps: one big MXU matmul ----
    x2d = x_ref[...].reshape(T * B, F).astype(wdt)          # layout-free (B%8==0, F=128)
    proj = (jnp.dot(x2d, wih0_ref[...], preferred_element_type=jnp.float32)
            + b0_ref[...]).reshape(T, B, H4)                # time-major: proj[t] contiguous

    wbig = wbig_ref[...]
    b1 = jnp.broadcast_to(b1_ref[...], (B, H4))             # broadcast once, outside loop

    def gate_math(gates, c):
        # gate column order (i, f, o, g): one contiguous sigmoid slab + one tanh slab
        ifo = jax.nn.sigmoid(gates[:, :3 * H])
        g = jnp.tanh(gates[:, 3 * H:])
        i = ifo[:, 0 * H:1 * H]
        f = ifo[:, 1 * H:2 * H]
        o = ifo[:, 2 * H:3 * H]
        c_new = f * c + i * g
        h_new = o * jnp.tanh(c_new)
        return h_new, c_new

    # t = 0, layer 0: previous h0 is zero, so its gates are just proj[0].
    h0, c0 = gate_math(proj[0], jnp.zeros((B, H), jnp.float32))
    h1 = jnp.zeros((B, H), jnp.float32)
    c1 = jnp.zeros((B, H), jnp.float32)

    # Skewed recurrence: ONE (B, 2H) x (2H, 8H) matmul per step yields both
    # layer-1 gates at step t and layer-0's recurrent term for step t+1.
    # T is static and small -> unrolled Python loop, state stays in vregs.
    # TODO(synk): if T grows, switch to lax.fori_loop(unroll=2-4) to bound live ranges.
    for t in range(T):
        lhs = jnp.concatenate([h0, h1], axis=1).astype(wdt)            # [h0_t, h1_{t-1}]
        big = jnp.dot(lhs, wbig, preferred_element_type=jnp.float32)   # (B, 8H)

        h1, c1 = gate_math(big[:, H4:] + b1, c1)                       # layer 1, step t
        if t < T - 1:                                                  # static (unrolled)
            h0, c0 = gate_math(proj[t + 1] + big[:, :H4], c0)          # layer 0, step t+1

    # Dense head on the last timestep's top-layer hidden state (lane-dense store).
    out_ref[...] = (jnp.dot(h1.astype(wdt), wd_ref[...],
                            preferred_element_type=jnp.float32)
                    + bd_ref[...]).astype(out_ref.dtype)


def _round_up(x, m):
    return (x + m - 1) // m * m


def _resident_spec(arr):
    zeros = (0,) * arr.ndim
    return pl.BlockSpec(arr.shape, lambda b: zeros)   # whole array, same block every step


def lane_change_forward(input_seq, kparams, *, batch_block=256):
    """input_seq: (B, T, F) float32.  Returns (B, OUTPUT_CLASSES) float32."""
    B, T, F = input_seq.shape
    C = OUTPUT_CLASSES

    # Sublane-pad the batch (f32 sublane = 8) and pick the per-grid-step batch block.
    B_blk = min(batch_block, _round_up(B, 8))
    B_pad = _round_up(B, B_blk)
    if B_pad != B:
        input_seq = jnp.pad(input_seq, ((0, B_pad - B), (0, 0), (0, 0)))
    x_tm = jnp.transpose(input_seq, (1, 0, 2))           # (T, B_pad, F) time-major

    weights = (kparams["wih0"], kparams["wbig"], kparams["b0"],
               kparams["b1"], kparams["wd"], kparams["bd"])

    out_padded = pl.pallas_call(
        _lstm_dense_kernel,
        out_shape=jax.ShapeDtypeStruct((B_pad, LANES), jnp.float32),
        grid=(B_pad // B_blk,),
        in_specs=[pl.BlockSpec((T, B_blk, F), lambda b: (0, b, 0))]
                 + [_resident_spec(w) for w in weights],
        out_specs=pl.BlockSpec((B_blk, LANES), lambda b: (b, 0)),
        compiler_params=pltpu.CompilerParams(
            dimension_semantics=("parallel",),           # megacore-shard the batch grid
            vmem_limit_bytes=48 * 1024 * 1024),          # headroom, still < v7x 64 MiB VMEM
    )(x_tm, *weights)

    # Drop the batch padding and the lane padding of the dense head.
    return out_padded[:B, :C]


# ----------------------------- parameter handling -----------------------------

def init_params(key):
    """Deterministic params in PyTorch-native shapes (LSTM/Linear default uniform init)."""
    H, F, C = RNN_HIDDEN, FEATURE_SIZE, OUTPUT_CLASSES
    bound = 1.0 / jnp.sqrt(H)
    ks = jax.random.split(key, 10)

    def u(k, shape):
        return jax.random.uniform(k, shape, jnp.float32, -bound, bound)

    return {
        # PyTorch shapes: weight_ih_l0 (4H,F), weight_hh_l0 (4H,H), biases (4H,)
        "wih0": u(ks[0], (4 * H, F)), "whh0": u(ks[1], (4 * H, H)),
        "bih0": u(ks[2], (4 * H,)),   "bhh0": u(ks[3], (4 * H,)),
        "wih1": u(ks[4], (4 * H, H)), "whh1": u(ks[5], (4 * H, H)),
        "bih1": u(ks[6], (4 * H,)),   "bhh1": u(ks[7], (4 * H,)),
        "wd":   u(ks[8], (C, H)),     "bd":   u(ks[9], (C,)),
    }


def _reorder_gates(w):
    """Last axis is 4H in PyTorch order (i,f,g,o) -> reorder to (i,f,o,g)."""
    i, f, g, o = jnp.split(w, 4, axis=-1)
    return jnp.concatenate([i, f, o, g], axis=-1)


def prep_kernel_params(p, weight_dtype=jnp.float32):
    """Transpose to (in, out), reorder gates, fold biases, build the skew-fused
    recurrent weight and the lane-padded dense head.  weight_dtype=bf16 halves
    weight DMA and uses the native bf16 MXU path (accumulation stays f32)."""
    H, C = RNN_HIDDEN, OUTPUT_CLASSES
    wih0 = _reorder_gates(p["wih0"].T)                       # (F, 4H)
    whh0 = _reorder_gates(p["whh0"].T)                       # (H, 4H)
    wih1 = _reorder_gates(p["wih1"].T)                       # (H, 4H)
    whh1 = _reorder_gates(p["whh1"].T)                       # (H, 4H)
    b0 = _reorder_gates((p["bih0"] + p["bhh0"]).reshape(1, 4 * H))
    b1 = _reorder_gates((p["bih1"] + p["bhh1"]).reshape(1, 4 * H))

    # Skew fusion: [h0_t, h1_{t-1}] @ [[whh0, wih1], [0, whh1]]  -> (2H, 8H)
    wbig = jnp.concatenate(
        [jnp.concatenate([whh0, wih1], axis=1),
         jnp.concatenate([jnp.zeros_like(whh1), whh1], axis=1)], axis=0)

    # Lane-dense dense head: pad output columns to 128 (extra columns are zero).
    wd = jnp.zeros((H, LANES), jnp.float32).at[:, :C].set(p["wd"].T)
    bd = jnp.zeros((1, LANES), jnp.float32).at[:, :C].set(p["bd"])

    return {
        "wih0": wih0.astype(weight_dtype),
        "wbig": wbig.astype(weight_dtype),
        "b0": b0, "b1": b1,                      # biases stay f32 (added to f32 acc)
        "wd": wd.astype(weight_dtype), "bd": bd,
    }


# ------------------------------- pure-JAX reference ---------------------------

def _reference_forward(input_seq, p):
    """Pure-JAX reference of the PyTorch forward (original gate order / shapes)."""
    H = RNN_HIDDEN
    B = input_seq.shape[0]

    def cell(x_t, h, c, wih, whh, bih, bhh):
        gates = x_t @ wih.T + h @ whh.T + bih + bhh
        i = jax.nn.sigmoid(gates[:, 0 * H:1 * H])
        f = jax.nn.sigmoid(gates[:, 1 * H:2 * H])
        g = jnp.tanh(gates[:, 2 * H:3 * H])
        o = jax.nn.sigmoid(gates[:, 3 * H:4 * H])
        c = f * c + i * g
        h = o * jnp.tanh(c)
        return h, c

    h0 = c0 = h1 = c1 = jnp.zeros((B, H), jnp.float32)
    for t in range(input_seq.shape[1]):
        x_t = input_seq[:, t, :]
        h0, c0 = cell(x_t, h0, c0, p["wih0"], p["whh0"], p["bih0"], p["bhh0"])
        h1, c1 = cell(h0, h1, c1, p["wih1"], p["whh1"], p["bih1"], p["bhh1"])
    return h1 @ p["wd"].T + p["bd"]


if __name__ == "__main__":
    key = jax.random.PRNGKey(0)
    k_param, k_x = jax.random.split(key)

    B, T = 2, 8
    x = jax.random.normal(k_x, (B, T, FEATURE_SIZE), jnp.float32)

    params = init_params(k_param)
    ref = _reference_forward(x, params)

    # f32 weights: strict check against the PyTorch-semantics reference.
    out_f32 = jax.block_until_ready(
        lane_change_forward(x, prep_kernel_params(params, jnp.float32)))
    assert out_f32.shape == (B, OUTPUT_CLASSES)
    assert jnp.allclose(out_f32, ref, atol=1e-4, rtol=1e-4), (out_f32, ref)

    # bf16 weights (halved weight DMA, native bf16 MXU on v6e/v7x): loose check.
    out_bf16 = jax.block_until_ready(
        lane_change_forward(x, prep_kernel_params(params, jnp.bfloat16)))
    assert out_bf16.shape == (B, OUTPUT_CLASSES)
    assert jnp.allclose(out_bf16, ref, atol=5e-2, rtol=5e-2), (out_bf16, ref)

    print("KERNEL_OK")
</pallas_src>

<mosaic_0001>
module attributes {stable_mosaic.version = 11 : i64} {
  func.func @_lstm_dense_kernel(%arg0: i32, %arg1: memref<8x8x128xf32, #tpu.memory_space<vmem>>, %arg2: memref<128x256xf32, #tpu.memory_space<vmem>>, %arg3: memref<128x512xf32, #tpu.memory_space<vmem>>, %arg4: memref<1x256xf32, #tpu.memory_space<vmem>>, %arg5: memref<1x256xf32, #tpu.memory_space<vmem>>, %arg6: memref<64x128xf32, #tpu.memory_space<vmem>>, %arg7: memref<1x128xf32, #tpu.memory_space<vmem>>, %arg8: memref<8x128xf32, #tpu.memory_space<vmem>>) attributes {dimension_semantics = [#tpu.dimension_semantics<parallel>], iteration_bounds = array<i64: 1>, scalar_prefetch = 0 : i64, scratch_operands = 0 : i64, tpu.core_type = #tpu.core_type<tc>, window_params = [{transform_indices = @transform_0, window_bounds = array<i64: 8, 8, 128>}, {pipeline_mode = #tpu.pipeline_mode<synchronous>, transform_indices = @transform_1, window_bounds = array<i64: 128, 256>}, {pipeline_mode = #tpu.pipeline_mode<synchronous>, transform_indices = @transform_2, window_bounds = array<i64: 128, 512>}, {pipeline_mode = #tpu.pipeline_mode<synchronous>, transform_indices = @transform_3, window_bounds = array<i64: 1, 256>}, {pipeline_mode = #tpu.pipeline_mode<synchronous>, transform_indices = @transform_4, window_bounds = array<i64: 1, 256>}, {pipeline_mode = #tpu.pipeline_mode<synchronous>, transform_indices = @transform_5, window_bounds = array<i64: 64, 128>}, {pipeline_mode = #tpu.pipeline_mode<synchronous>, transform_indices = @transform_6, window_bounds = array<i64: 1, 128>}, {transform_indices = @transform_7, window_bounds = array<i64: 8, 128>}]} {
    %c0 = arith.constant 0 : index
    %c0_0 = arith.constant 0 : index
    %c0_1 = arith.constant 0 : index
    %0 = vector.load %arg1[%c0, %c0_0, %c0_1] : memref<8x8x128xf32, #tpu.memory_space<vmem>>, vector<8x8x128xf32>
    %1 = vector.shape_cast %0 : vector<8x8x128xf32> to vector<64x128xf32>
    %c0_2 = arith.constant 0 : index
    %c0_3 = arith.constant 0 : index
    %2 = vector.load %arg2[%c0_2, %c0_3] : memref<128x256xf32, #tpu.memory_space<vmem>>, vector<128x256xf32>
    %cst = arith.constant dense<0.000000e+00> : vector<64x256xf32>
    %3 = tpu.matmul %1, %2, %cst {dimension_numbers = #tpu.dot_dimension_numbers<[1], [0], [0], [1], [0, 0, 1, 1], [], []>} : vector<64x128xf32>, vector<128x256xf32>, vector<64x256xf32> -> vector<64x256xf32>
    %c0_4 = arith.constant 0 : index
    %c0_5 = arith.constant 0 : index
    %4 = vector.load %arg4[%c0_4, %c0_5] : memref<1x256xf32, #tpu.memory_space<vmem>>, vector<1x256xf32>
    %5 = vector.broadcast %4 : vector<1x256xf32> to vector<64x256xf32>
    %6 = arith.addf %3, %5 : vector<64x256xf32>
    %7 = vector.shape_cast %6 : vector<64x256xf32> to vector<8x8x256xf32>
    %c0_6 = arith.constant 0 : index
    %c0_7 = arith.constant 0 : index
    %8 = vector.load %arg3[%c0_6, %c0_7] : memref<128x512xf32, #tpu.memory_space<vmem>>, vector<128x512xf32>
    %c0_8 = arith.constant 0 : index
    %c0_9 = arith.constant 0 : index
    %9 = vector.load %arg5[%c0_8, %c0_9] : memref<1x256xf32, #tpu.memory_space<vmem>>, vector<1x256xf32>
    %10 = vector.shape_cast %9 : vector<1x256xf32> to vector<1x256xf32>
    %11 = vector.broadcast %10 : vector<1x256xf32> to vector<8x256xf32>
    %12 = vector.extract_strided_slice %7 {offsets = [0, 0, 0], sizes = [1, 8, 256], strides = [1, 1, 1]} : vector<8x8x256xf32> to vector<1x8x256xf32>
    %13 = vector.shape_cast %12 : vector<1x8x256xf32> to vector<8x256xf32>
    %cst_10 = arith.constant 0.000000e+00 : f32
    %14 = vector.broadcast %cst_10 : f32 to vector<8x64xf32>
    %15 = vector.extract_strided_slice %13 {offsets = [0, 0], sizes = [8, 192], strides = [1, 1]} : vector<8x256xf32> to vector<8x192xf32>
    %16 = arith.negf %15 : vector<8x192xf32>
    %17 = math.exp %16 : vector<8x192xf32>
    %cst_11 = arith.constant 1.000000e+00 : f32
    %18 = vector.broadcast %cst_11 : f32 to vector<8x192xf32>
    %19 = arith.addf %18, %17 : vector<8x192xf32>
    %20 = arith.divf %18, %19 : vector<8x192xf32>
    %21 = vector.extract_strided_slice %13 {offsets = [0, 192], sizes = [8, 64], strides = [1, 1]} : vector<8x256xf32> to vector<8x64xf32>
    %22 = math.tanh %21 : vector<8x64xf32>
    %23 = vector.extract_strided_slice %20 {offsets = [0, 0], sizes = [8, 64], strides = [1, 1]} : vector<8x192xf32> to vector<8x64xf32>
    %24 = vector.extract_strided_slice %20 {offsets = [0, 64], sizes = [8, 64], strides = [1, 1]} : vector<8x192xf32> to vector<8x64xf32>
    %25 = vector.extract_strided_slice %20 {offsets = [0, 128], sizes = [8, 64], strides = [1, 1]} : vector<8x192xf32> to vector<8x64xf32>
    %26 = arith.mulf %24, %14 : vector<8x64xf32>
    %27 = arith.mulf %23, %22 : vector<8x64xf32>
    %28 = arith.addf %26, %27 : vector<8x64xf32>
    %29 = math.tanh %28 : vector<8x64xf32>
    %30 = arith.mulf %25, %29 : vector<8x64xf32>
    %cst_12 = arith.constant 0.000000e+00 : f32
    %31 = vector.broadcast %cst_12 : f32 to vector<8x64xf32>
    %cst_13 = arith.constant 0.000000e+00 : f32
    %32 = vector.broadcast %cst_13 : f32 to vector<8x64xf32>
    %33 = tpu.concatenate %30, %31 in 1 : vector<8x64xf32>, vector<8x64xf32> -> vector<8x128xf32>
    %cst_14 = arith.constant dense<0.000000e+00> : vector<8x512xf32>
    %34 = tpu.matmul %33, %8, %cst_14 {dimension_numbers = #tpu.dot_dimension_numbers<[1], [0], [0], [1], [0, 0, 1, 1], [], []>} : vector<8x128xf32>, vector<128x512xf32>, vector<8x512xf32> -> vector<8x512xf32>
    %35 = vector.extract_strided_slice %34 {offsets = [0, 256], sizes = [8, 256], strides = [1, 1]} : vector<8x512xf32> to vector<8x256xf32>
    %36 = arith.addf %35, %11 : vector<8x256xf32>
    %37 = vector.extract_strided_slice %36 {offsets = [0, 0], sizes = [8, 192], strides = [1, 1]} : vector<8x256xf32> to vector<8x192xf32>
    %38 = arith.negf %37 : vector<8x192xf32>
    %39 = math.exp %38 : vector<8x192xf32>
    %cst_15 = arith.constant 1.000000e+00 : f32
    %40 = vector.broadcast %cst_15 : f32 to vector<8x192xf32>
    %41 = arith.addf %40, %39 : vector<8x192xf32>
    %42 = arith.divf %40, %41 : vector<8x192xf32>
    %43 = vector.extract_strided_slice %36 {offsets = [0, 192], sizes = [8, 64], strides = [1, 1]} : vector<8x256xf32> to vector<8x64xf32>
    %44 = math.tanh %43 : vector<8x64xf32>
    %45 = vector.extract_strided_slice %42 {offsets = [0, 0], sizes = [8, 64], strides = [1, 1]} : vector<8x192xf32> to vector<8x64xf32>
    %46 = vector.extract_strided_slice %42 {offsets = [0, 64], sizes = [8, 64], strides = [1, 1]} : vector<8x192xf32> to vector<8x64xf32>
    %47 = vector.extract_strided_slice %42 {offsets = [0, 128], sizes = [8, 64], strides = [1, 1]} : vector<8x192xf32> to vector<8x64xf32>
    %48 = arith.mulf %46, %32 : vector<8x64xf32>
    %49 = arith.mulf %45, %44 : vector<8x64xf32>
    %50 = arith.addf %48, %49 : vector<8x64xf32>
    %51 = math.tanh %50 : vector<8x64xf32>
    %52 = arith.mulf %47, %51 : vector<8x64xf32>
    %53 = vector.extract_strided_slice %7 {offsets = [1, 0, 0], sizes = [1, 8, 256], strides = [1, 1, 1]} : vector<8x8x256xf32> to vector<1x8x256xf32>
    %54 = vector.shape_cast %53 : vector<1x8x256xf32> to vector<8x256xf32>
    %55 = vector.extract_strided_slice %34 {offsets = [0, 0], sizes = [8, 256], strides = [1, 1]} : vector<8x512xf32> to vector<8x256xf32>
    %56 = arith.addf %54, %55 : vector<8x256xf32>
    %57 = vector.extract_strided_slice %56 {offsets = [0, 0], sizes = [8, 192], strides = [1, 1]} : vector<8x256xf32> to vector<8x192xf32>
    %58 = arith.negf %57 : vector<8x192xf32>
    %59 = math.exp %58 : vector<8x192xf32>
    %cst_16 = arith.constant 1.000000e+00 : f32
    %60 = vector.broadcast %cst_16 : f32 to vector<8x192xf32>
    %61 = arith.addf %60, %59 : vector<8x192xf32>
    %62 = arith.divf %60, %61 : vector<8x192xf32>
    %63 = vector.extract_strided_slice %56 {offsets = [0, 192], sizes = [8, 64], strides = [1, 1]} : vector<8x256xf32> to vector<8x64xf32>
    %64 = math.tanh %63 : vector<8x64xf32>
    %65 = vector.extract_strided_slice %62 {offsets = [0, 0], sizes = [8, 64], strides = [1, 1]} : vector<8x192xf32> to vector<8x64xf32>
    %66 = vector.extract_strided_slice %62 {offsets = [0, 64], sizes = [8, 64], strides = [1, 1]} : vector<8x192xf32> to vector<8x64xf32>
    %67 = vector.extract_strided_slice %62 {offsets = [0, 128], sizes = [8, 64], strides = [1, 1]} : vector<8x192xf32> to vector<8x64xf32>
    %68 = arith.mulf %66, %28 : vector<8x64xf32>
    %69 = arith.mulf %65, %64 : vector<8x64xf32>
    %70 = arith.addf %68, %69 : vector<8x64xf32>
    %71 = math.tanh %70 : vector<8x64xf32>
    %72 = arith.mulf %67, %71 : vector<8x64xf32>
    %73 = tpu.concatenate %72, %52 in 1 : vector<8x64xf32>, vector<8x64xf32> -> vector<8x128xf32>
    %cst_17 = arith.constant dense<0.000000e+00> : vector<8x512xf32>
    %74 = tpu.matmul %73, %8, %cst_17 {dimension_numbers = #tpu.dot_dimension_numbers<[1], [0], [0], [1], [0, 0, 1, 1], [], []>} : vector<8x128xf32>, vector<128x512xf32>, vector<8x512xf32> -> vector<8x512xf32>
    %75 = vector.extract_strided_slice %74 {offsets = [0, 256], sizes = [8, 256], strides = [1, 1]} : vector<8x512xf32> to vector<8x256xf32>
    %76 = arith.addf %75, %11 : vector<8x256xf32>
    %77 = vector.extract_strided_slice %76 {offsets = [0, 0], sizes = [8, 192], strides = [1, 1]} : vector<8x256xf32> to vector<8x192xf32>
    %78 = arith.negf %77 : vector<8x192xf32>
    %79 = math.exp %78 : vector<8x192xf32>
    %cst_18 = arith.constant 1.000000e+00 : f32
    %80 = vector.broadcast %cst_18 : f32 to vector<8x192xf32>
    %81 = arith.addf %80, %79 : vector<8x192xf32>
    %82 = arith.divf %80, %81 : vector<8x192xf32>
    %83 = vector.extract_strided_slice %76 {offsets = [0, 192], sizes = [8, 64], strides = [1, 1]} : vector<8x256xf32> to vector<8x64xf32>
    %84 = math.tanh %83 : vector<8x64xf32>
    %85 = vector.extract_strided_slice %82 {offsets = [0, 0], sizes = [8, 64], strides = [1, 1]} : vector<8x192xf32> to vector<8x64xf32>
    %86 = vector.extract_strided_slice %82 {offsets = [0, 64], sizes = [8, 64], strides = [1, 1]} : vector<8x192xf32> to vector<8x64xf32>
    %87 = vector.extract_strided_slice %82 {offsets = [0, 128], sizes = [8, 64], strides = [1, 1]} : vector<8x192xf32> to vector<8x64xf32>
    %88 = arith.mulf %86, %50 : vector<8x64xf32>
    %89 = arith.mulf %85, %84 : vector<8x64xf32>
    %90 = arith.addf %88, %89 : vector<8x64xf32>
    %91 = math.tanh %90 : vector<8x64xf32>
    %92 = arith.mulf %87, %91 : vector<8x64xf32>
    %93 = vector.extract_strided_slice %7 {offsets = [2, 0, 0], sizes = [1, 8, 256], strides = [1, 1, 1]} : vector<8x8x256xf32> to vector<1x8x256xf32>
    %94 = vector.shape_cast %93 : vector<1x8x256xf32> to vector<8x256xf32>
    %95 = vector.extract_strided_slice %74 {offsets = [0, 0], sizes = [8, 256], strides = [1, 1]} : vector<8x512xf32> to vector<8x256xf32>
    %96 = arith.addf %94, %95 : vector<8x256xf32>
    %97 = vector.extract_strided_slice %96 {offsets = [0, 0], sizes = [8, 192], strides = [1, 1]} : vector<8x256xf32> to vector<8x192xf32>
    %98 = arith.negf %97 : vector<8x192xf32>
    %99 = math.exp %98 : vector<8x192xf32>
    %cst_19 = arith.constant 1.000000e+00 : f32
    %100 = vector.broadcast %cst_19 : f32 to vector<8x192xf32>
    %101 = arith.addf %100, %99 : vector<8x192xf32>
    %102 = arith.divf %100, %101 : vector<8x192xf32>
    %103 = vector.extract_strided_slice %96 {offsets = [0, 192], sizes = [8, 64], strides = [1, 1]} : vector<8x256xf32> to vector<8x64xf32>
    %104 = math.tanh %103 : vector<8x64xf32>
    %105 = vector.extract_strided_slice %102 {offsets = [0, 0], sizes = [8, 64], strides = [1, 1]} : vector<8x192xf32> to vector<8x64xf32>
    %106 = vector.extract_strided_slice %102 {offsets = [0, 64], sizes = [8, 64], strides = [1, 1]} : vector<8x192xf32> to vector<8x64xf32>
    %107 = vector.extract_strided_slice %102 {offsets = [0, 128], sizes = [8, 64], strides = [1, 1]} : vector<8x192xf32> to vector<8x64xf32>
    %108 = arith.mulf %106, %70 : vector<8x64xf32>
    %109 = arith.mulf %105, %104 : vector<8x64xf32>
    %110 = arith.addf %108, %109 : vector<8x64xf32>
    %111 = math.tanh %110 : vector<8x64xf32>
    %112 = arith.mulf %107, %111 : vector<8x64xf32>
    %113 = tpu.concatenate %112, %92 in 1 : vector<8x64xf32>, vector<8x64xf32> -> vector<8x128xf32>
    %cst_20 = arith.constant dense<0.000000e+00> : vector<8x512xf32>
    %114 = tpu.matmul %113, %8, %cst_20 {dimension_numbers = #tpu.dot_dimension_numbers<[1], [0], [0], [1], [0, 0, 1, 1], [], []>} : vector<8x128xf32>, vector<128x512xf32>, vector<8x512xf32> -> vector<8x512xf32>
    %115 = vector.extract_strided_slice %114 {offsets = [0, 256], sizes = [8, 256], strides = [1, 1]} : vector<8x512xf32> to vector<8x256xf32>
    %116 = arith.addf %115, %11 : vector<8x256xf32>
    %117 = vector.extract_strided_slice %116 {offsets = [0, 0], sizes = [8, 192], strides = [1, 1]} : vector<8x256xf32> to vector<8x192xf32>
    %118 = arith.negf %117 : vector<8x192xf32>
    %119 = math.exp %118 : vector<8x192xf32>
    %cst_21 = arith.constant 1.000000e+00 : f32
    %120 = vector.broadcast %cst_21 : f32 to vector<8x192xf32>
    %121 = arith.addf %120, %119 : vector<8x192xf32>
    %122 = arith.divf %120, %121 : vector<8x192xf32>
    %123 = vector.extract_strided_slice %116 {offsets = [0, 192], sizes = [8, 64], strides = [1, 1]} : vector<8x256xf32> to vector<8x64xf32>
    %124 = math.tanh %123 : vector<8x64xf32>
    %125 = vector.extract_strided_slice %122 {offsets = [0, 0], sizes = [8, 64], strides = [1, 1]} : vector<8x192xf32> to vector<8x64xf32>
    %126 = vector.extract_strided_slice %122 {offsets = [0, 64], sizes = [8, 64], strides = [1, 1]} : vector<8x192xf32> to vector<8x64xf32>
    %127 = vector.extract_strided_slice %122 {offsets = [0, 128], sizes = [8, 64], strides = [1, 1]} : vector<8x192xf32> to vector<8x64xf32>
    %128 = arith.mulf %126, %90 : vector<8x64xf32>
    %129 = arith.mulf %125, %124 : vector<8x64xf32>
    %130 = arith.addf %128, %129 : vector<8x64xf32>
    %131 = math.tanh %130 : vector<8x64xf32>
    %132 = arith.mulf %127, %131 : vector<8x64xf32>
    %133 = vector.extract_strided_slice %7 {offsets = [3, 0, 0], sizes = [1, 8, 256], strides = [1, 1, 1]} : vector<8x8x256xf32> to vector<1x8x256xf32>
    %134 = vector.shape_cast %133 : vector<1x8x256xf32> to vector<8x256xf32>
    %135 = vector.extract_strided_slice %114 {offsets = [0, 0], sizes = [8, 256], strides = [1, 1]} : vector<8x512xf32> to vector<8x256xf32>
    %136 = arith.addf %134, %135 : vector<8x256xf32>
    %137 = vector.extract_strided_slice %136 {offsets = [0, 0], sizes = [8, 192], strides = [1, 1]} : vector<8x256xf32> to vector<8x192xf32>
    %138 = arith.negf %137 : vector<8x192xf32>
    %139 = math.exp %138 : vector<8x192xf32>
    %cst_22 = arith.constant 1.000000e+00 : f32
    %140 = vector.broadcast %cst_22 : f32 to vector<8x192xf32>
    %141 = arith.addf %140, %139 : vector<8x192xf32>
    %142 = arith.divf %140, %141 : vector<8x192xf32>
    %143 = vector.extract_strided_slice %136 {offsets = [0, 192], sizes = [8, 64], strides = [1, 1]} : vector<8x256xf32> to vector<8x64xf32>
    %144 = math.tanh %143 : vector<8x64xf32>
    %145 = vector.extract_strided_slice %142 {offsets = [0, 0], sizes = [8, 64], strides = [1, 1]} : vector<8x192xf32> to vector<8x64xf32>
    %146 = vector.extract_strided_slice %142 {offsets = [0, 64], sizes = [8, 64], strides = [1, 1]} : vector<8x192xf32> to vector<8x64xf32>
    %147 = vector.extract_strided_slice %142 {offsets = [0, 128], sizes = [8, 64], strides = [1, 1]} : vector<8x192xf32> to vector<8x64xf32>
    %148 = arith.mulf %146, %110 : vector<8x64xf32>
    %149 = arith.mulf %145, %144 : vector<8x64xf32>
    %150 = arith.addf %148, %149 : vector<8x64xf32>
    %151 = math.tanh %150 : vector<8x64xf32>
    %152 = arith.mulf %147, %151 : vector<8x64xf32>
    %153 = tpu.concatenate %152, %132 in 1 : vector<8x64xf32>, vector<8x64xf32> -> vector<8x128xf32>
    %cst_23 = arith.constant dense<0.000000e+00> : vector<8x512xf32>
    %154 = tpu.matmul %153, %8, %cst_23 {dimension_numbers = #tpu.dot_dimension_numbers<[1], [0], [0], [1], [0, 0, 1, 1], [], []>} : vector<8x128xf32>, vector<128x512xf32>, vector<8x512xf32> -> vector<8x512xf32>
    %155 = vector.extract_strided_slice %154 {offsets = [0, 256], sizes = [8, 256], strides = [1, 1]} : vector<8x512xf32> to vector<8x256xf32>
    %156 = arith.addf %155, %11 : vector<8x256xf32>
    %157 = vector.extract_strided_slice %156 {offsets = [0, 0], sizes = [8, 192], strides = [1, 1]} : vector<8x256xf32> to vector<8x192xf32>
    %158 = arith.negf %157 : vector<8x192xf32>
    %159 = math.exp %158 : vector<8x192xf32>
    %cst_24 = arith.constant 1.000000e+00 : f32
    %160 = vector.broadcast %cst_24 : f32 to vector<8x192xf32>
    %161 = arith.addf %160, %159 : vector<8x192xf32>
    %162 = arith.divf %160, %161 : vector<8x192xf32>
    %163 = vector.extract_strided_slice %156 {offsets = [0, 192], sizes = [8, 64], strides = [1, 1]} : vector<8x256xf32> to vector<8x64xf32>
    %164 = math.tanh %163 : vector<8x64xf32>
    %165 = vector.extract_strided_slice %162 {offsets = [0, 0], sizes = [8, 64], strides = [1, 1]} : vector<8x192xf32> to vector<8x64xf32>
    %166 = vector.extract_strided_slice %162 {offsets = [0, 64], sizes = [8, 64], strides = [1, 1]} : vector<8x192xf32> to vector<8x64xf32>
    %167 = vector.extract_strided_slice %162 {offsets = [0, 128], sizes = [8, 64], strides = [1, 1]} : vector<8x192xf32> to vector<8x64xf32>
    %168 = arith.mulf %166, %130 : vector<8x64xf32>
    %169 = arith.mulf %165, %164 : vector<8x64xf32>
    %170 = arith.addf %168, %169 : vector<8x64xf32>
    %171 = math.tanh %170 : vector<8x64xf32>
    %172 = arith.mulf %167, %171 : vector<8x64xf32>
    %173 = vector.extract_strided_slice %7 {offsets = [4, 0, 0], sizes = [1, 8, 256], strides = [1, 1, 1]} : vector<8x8x256xf32> to vector<1x8x256xf32>
    %174 = vector.shape_cast %173 : vector<1x8x256xf32> to vector<8x256xf32>
    %175 = vector.extract_strided_slice %154 {offsets = [0, 0], sizes = [8, 256], strides = [1, 1]} : vector<8x512xf32> to vector<8x256xf32>
    %176 = arith.addf %174, %175 : vector<8x256xf32>
    %177 = vector.extract_strided_slice %176 {offsets = [0, 0], sizes = [8, 192], strides = [1, 1]} : vector<8x256xf32> to vector<8x192xf32>
    %178 = arith.negf %177 : vector<8x192xf32>
    %179 = math.exp %178 : vector<8x192xf32>
    %cst_25 = arith.constant 1.000000e+00 : f32
    %180 = vector.broadcast %cst_25 : f32 to vector<8x192xf32>
    %181 = arith.addf %180, %179 : vector<8x192xf32>
    %182 = arith.divf %180, %181 : vector<8x192xf32>
    %183 = vector.extract_strided_slice %176 {offsets = [0, 192], sizes = [8, 64], strides = [1, 1]} : vector<8x256xf32> to vector<8x64xf32>
    %184 = math.tanh %183 : vector<8x64xf32>
    %185 = vector.extract_strided_slice %182 {offsets = [0, 0], sizes = [8, 64], strides = [1, 1]} : vector<8x192xf32> to vector<8x64xf32>
    %186 = vector.extract_strided_slice %182 {offsets = [0, 64], sizes = [8, 64], strides = [1, 1]} : vector<8x192xf32> to vector<8x64xf32>
    %187 = vector.extract_strided_slice %182 {offsets = [0, 128], sizes = [8, 64], strides = [1, 1]} : vector<8x192xf32> to vector<8x64xf32>
    %188 = arith.mulf %186, %150 : vector<8x64xf32>
    %189 = arith.mulf %185, %184 : vector<8x64xf32>
    %190 = arith.addf %188, %189 : vector<8x64xf32>
    %191 = math.tanh %190 : vector<8x64xf32>
    %192 = arith.mulf %187, %191 : vector<8x64xf32>
    %193 = tpu.concatenate %192, %172 in 1 : vector<8x64xf32>, vector<8x64xf32> -> vector<8x128xf32>
    %cst_26 = arith.constant dense<0.000000e+00> : vector<8x512xf32>
    %194 = tpu.matmul %193, %8, %cst_26 {dimension_numbers = #tpu.dot_dimension_numbers<[1], [0], [0], [1], [0, 0, 1, 1], [], []>} : vector<8x128xf32>, vector<128x512xf32>, vector<8x512xf32> -> vector<8x512xf32>
    %195 = vector.extract_strided_slice %194 {offsets = [0, 256], sizes = [8, 256], strides = [1, 1]} : vector<8x512xf32> to vector<8x256xf32>
    %196 = arith.addf %195, %11 : vector<8x256xf32>
    %197 = vector.extract_strided_slice %196 {offsets = [0, 0], sizes = [8, 192], strides = [1, 1]} : vector<8x256xf32> to vector<8x192xf32>
    %198 = arith.negf %197 : vector<8x192xf32>
    %199 = math.exp %198 : vector<8x192xf32>
    %cst_27 = arith.constant 1.000000e+00 : f32
    %200 = vector.broadcast %cst_27 : f32 to vector<8x192xf32>
    %201 = arith.addf %200, %199 : vector<8x192xf32>
    %202 = arith.divf %200, %201 : vector<8x192xf32>
    %203 = vector.extract_strided_slice %196 {offsets = [0, 192], sizes = [8, 64], strides = [1, 1]} : vector<8x256xf32> to vector<8x64xf32>
    %204 = math.tanh %203 : vector<8x64xf32>
    %205 = vector.extract_strided_slice %202 {offsets = [0, 0], sizes = [8, 64], strides = [1, 1]} : vector<8x192xf32> to vector<8x64xf32>
    %206 = vector.extract_strided_slice %202 {offsets = [0, 64], sizes = [8, 64], strides = [1, 1]} : vector<8x192xf32> to vector<8x64xf32>
    %207 = vector.extract_strided_slice %202 {offsets = [0, 128], sizes = [8, 64], strides = [1, 1]} : vector<8x192xf32> to vector<8x64xf32>
    %208 = arith.mulf %206, %170 : vector<8x64xf32>
    %209 = arith.mulf %205, %204 : vector<8x64xf32>
    %210 = arith.addf %208, %209 : vector<8x64xf32>
    %211 = math.tanh %210 : vector<8x64xf32>
    %212 = arith.mulf %207, %211 : vector<8x64xf32>
    %213 = vector.extract_strided_slice %7 {offsets = [5, 0, 0], sizes = [1, 8, 256], strides = [1, 1, 1]} : vector<8x8x256xf32> to vector<1x8x256xf32>
    %214 = vector.shape_cast %213 : vector<1x8x256xf32> to vector<8x256xf32>
    %215 = vector.extract_strided_slice %194 {offsets = [0, 0], sizes = [8, 256], strides = [1, 1]} : vector<8x512xf32> to vector<8x256xf32>
    %216 = arith.addf %214, %215 : vector<8x256xf32>
    %217 = vector.extract_strided_slice %216 {offsets = [0, 0], sizes = [8, 192], strides = [1, 1]} : vector<8x256xf32> to vector<8x192xf32>
    %218 = arith.negf %217 : vector<8x192xf32>
    %219 = math.exp %218 : vector<8x192xf32>
    %cst_28 = arith.constant 1.000000e+00 : f32
    %220 = vector.broadcast %cst_28 : f32 to vector<8x192xf32>
    %221 = arith.addf %220, %219 : vector<8x192xf32>
    %222 = arith.divf %220, %221 : vector<8x192xf32>
    %223 = vector.extract_strided_slice %216 {offsets = [0, 192], sizes = [8, 64], strides = [1, 1]} : vector<8x256xf32> to vector<8x64xf32>
    %224 = math.tanh %223 : vector<8x64xf32>
    %225 = vector.extract_strided_slice %222 {offsets = [0, 0], sizes = [8, 64], strides = [1, 1]} : vector<8x192xf32> to vector<8x64xf32>
    %226 = vector.extract_strided_slice %222 {offsets = [0, 64], sizes = [8, 64], strides = [1, 1]} : vector<8x192xf32> to vector<8x64xf32>
    %227 = vector.extract_strided_slice %222 {offsets = [0, 128], sizes = [8, 64], strides = [1, 1]} : vector<8x192xf32> to vector<8x64xf32>
    %228 = arith.mulf %226, %190 : vector<8x64xf32>
    %229 = arith.mulf %225, %224 : vector<8x64xf32>
    %230 = arith.addf %228, %229 : vector<8x64xf32>
    %231 = math.tanh %230 : vector<8x64xf32>
    %232 = arith.mulf %227, %231 : vector<8x64xf32>
    %233 = tpu.concatenate %232, %212 in 1 : vector<8x64xf32>, vector<8x64xf32> -> vector<8x128xf32>
    %cst_29 = arith.constant dense<0.000000e+00> : vector<8x512xf32>
    %234 = tpu.matmul %233, %8, %cst_29 {dimension_numbers = #tpu.dot_dimension_numbers<[1], [0], [0], [1], [0, 0, 1, 1], [], []>} : vector<8x128xf32>, vector<128x512xf32>, vector<8x512xf32> -> vector<8x512xf32>
    %235 = vector.extract_strided_slice %234 {offsets = [0, 256], sizes = [8, 256], strides = [1, 1]} : vector<8x512xf32> to vector<8x256xf32>
    %236 = arith.addf %235, %11 : vector<8x256xf32>
    %237 = vector.extract_strided_slice %236 {offsets = [0, 0], sizes = [8, 192], strides = [1, 1]} : vector<8x256xf32> to vector<8x192xf32>
    %238 = arith.negf %237 : vector<8x192xf32>
    %239 = math.exp %238 : vector<8x192xf32>
    %cst_30 = arith.constant 1.000000e+00 : f32
    %240 = vector.broadcast %cst_30 : f32 to vector<8x192xf32>
    %241 = arith.addf %240, %239 : vector<8x192xf32>
    %242 = arith.divf %240, %241 : vector<8x192xf32>
    %243 = vector.extract_strided_slice %236 {offsets = [0, 192], sizes = [8, 64], strides = [1, 1]} : vector<8x256xf32> to vector<8x64xf32>
    %244 = math.tanh %243 : vector<8x64xf32>
    %245 = vector.extract_strided_slice %242 {offsets = [0, 0], sizes = [8, 64], strides = [1, 1]} : vector<8x192xf32> to vector<8x64xf32>
    %246 = vector.extract_strided_slice %242 {offsets = [0, 64], sizes = [8, 64], strides = [1, 1]} : vector<8x192xf32> to vector<8x64xf32>
    %247 = vector.extract_strided_slice %242 {offsets = [0, 128], sizes = [8, 64], strides = [1, 1]} : vector<8x192xf32> to vector<8x64xf32>
    %248 = arith.mulf %246, %210 : vector<8x64xf32>
    %249 = arith.mulf %245, %244 : vector<8x64xf32>
    %250 = arith.addf %248, %249 : vector<8x64xf32>
    %251 = math.tanh %250 : vector<8x64xf32>
    %252 = arith.mulf %247, %251 : vector<8x64xf32>
    %253 = vector.extract_strided_slice %7 {offsets = [6, 0, 0], sizes = [1, 8, 256], strides = [1, 1, 1]} : vector<8x8x256xf32> to vector<1x8x256xf32>
    %254 = vector.shape_cast %253 : vector<1x8x256xf32> to vector<8x256xf32>
    %255 = vector.extract_strided_slice %234 {offsets = [0, 0], sizes = [8, 256], strides = [1, 1]} : vector<8x512xf32> to vector<8x256xf32>
    %256 = arith.addf %254, %255 : vector<8x256xf32>
    %257 = vector.extract_strided_slice %256 {offsets = [0, 0], sizes = [8, 192], strides = [1, 1]} : vector<8x256xf32> to vector<8x192xf32>
    %258 = arith.negf %257 : vector<8x192xf32>
    %259 = math.exp %258 : vector<8x192xf32>
    %cst_31 = arith.constant 1.000000e+00 : f32
    %260 = vector.broadcast %cst_31 : f32 to vector<8x192xf32>
    %261 = arith.addf %260, %259 : vector<8x192xf32>
    %262 = arith.divf %260, %261 : vector<8x192xf32>
    %263 = vector.extract_strided_slice %256 {offsets = [0, 192], sizes = [8, 64], strides = [1, 1]} : vector<8x256xf32> to vector<8x64xf32>
    %264 = math.tanh %263 : vector<8x64xf32>
    %265 = vector.extract_strided_slice %262 {offsets = [0, 0], sizes = [8, 64], strides = [1, 1]} : vector<8x192xf32> to vector<8x64xf32>
    %266 = vector.extract_strided_slice %262 {offsets = [0, 64], sizes = [8, 64], strides = [1, 1]} : vector<8x192xf32> to vector<8x64xf32>
    %267 = vector.extract_strided_slice %262 {offsets = [0, 128], sizes = [8, 64], strides = [1, 1]} : vector<8x192xf32> to vector<8x64xf32>
    %268 = arith.mulf %266, %230 : vector<8x64xf32>
    %269 = arith.mulf %265, %264 : vector<8x64xf32>
    %270 = arith.addf %268, %269 : vector<8x64xf32>
    %271 = math.tanh %270 : vector<8x64xf32>
    %272 = arith.mulf %267, %271 : vector<8x64xf32>
    %273 = tpu.concatenate %272, %252 in 1 : vector<8x64xf32>, vector<8x64xf32> -> vector<8x128xf32>
    %cst_32 = arith.constant dense<0.000000e+00> : vector<8x512xf32>
    %274 = tpu.matmul %273, %8, %cst_32 {dimension_numbers = #tpu.dot_dimension_numbers<[1], [0], [0], [1], [0, 0, 1, 1], [], []>} : vector<8x128xf32>, vector<128x512xf32>, vector<8x512xf32> -> vector<8x512xf32>
    %275 = vector.extract_strided_slice %274 {offsets = [0, 256], sizes = [8, 256], strides = [1, 1]} : vector<8x512xf32> to vector<8x256xf32>
    %276 = arith.addf %275, %11 : vector<8x256xf32>
    %277 = vector.extract_strided_slice %276 {offsets = [0, 0], sizes = [8, 192], strides = [1, 1]} : vector<8x256xf32> to vector<8x192xf32>
    %278 = arith.negf %277 : vector<8x192xf32>
    %279 = math.exp %278 : vector<8x192xf32>
    %cst_33 = arith.constant 1.000000e+00 : f32
    %280 = vector.broadcast %cst_33 : f32 to vector<8x192xf32>
    %281 = arith.addf %280, %279 : vector<8x192xf32>
    %282 = arith.divf %280, %281 : vector<8x192xf32>
    %283 = vector.extract_strided_slice %276 {offsets = [0, 192], sizes = [8, 64], strides = [1, 1]} : vector<8x256xf32> to vector<8x64xf32>
    %284 = math.tanh %283 : vector<8x64xf32>
    %285 = vector.extract_strided_slice %282 {offsets = [0, 0], sizes = [8, 64], strides = [1, 1]} : vector<8x192xf32> to vector<8x64xf32>
    %286 = vector.extract_strided_slice %282 {offsets = [0, 64], sizes = [8, 64], strides = [1, 1]} : vector<8x192xf32> to vector<8x64xf32>
    %287 = vector.extract_strided_slice %282 {offsets = [0, 128], sizes = [8, 64], strides = [1, 1]} : vector<8x192xf32> to vector<8x64xf32>
    %288 = arith.mulf %286, %250 : vector<8x64xf32>
    %289 = arith.mulf %285, %284 : vector<8x64xf32>
    %290 = arith.addf %288, %289 : vector<8x64xf32>
    %291 = math.tanh %290 : vector<8x64xf32>
    %292 = arith.mulf %287, %291 : vector<8x64xf32>
    %293 = vector.extract_strided_slice %7 {offsets = [7, 0, 0], sizes = [1, 8, 256], strides = [1, 1, 1]} : vector<8x8x256xf32> to vector<1x8x256xf32>
    %294 = vector.shape_cast %293 : vector<1x8x256xf32> to vector<8x256xf32>
    %295 = vector.extract_strided_slice %274 {offsets = [0, 0], sizes = [8, 256], strides = [1, 1]} : vector<8x512xf32> to vector<8x256xf32>
    %296 = arith.addf %294, %295 : vector<8x256xf32>
    %297 = vector.extract_strided_slice %296 {offsets = [0, 0], sizes = [8, 192], strides = [1, 1]} : vector<8x256xf32> to vector<8x192xf32>
    %298 = arith.negf %297 : vector<8x192xf32>
    %299 = math.exp %298 : vector<8x192xf32>
    %cst_34 = arith.constant 1.000000e+00 : f32
    %300 = vector.broadcast %cst_34 : f32 to vector<8x192xf32>
    %301 = arith.addf %300, %299 : vector<8x192xf32>
    %302 = arith.divf %300, %301 : vector<8x192xf32>
    %303 = vector.extract_strided_slice %296 {offsets = [0, 192], sizes = [8, 64], strides = [1, 1]} : vector<8x256xf32> to vector<8x64xf32>
    %304 = math.tanh %303 : vector<8x64xf32>
    %305 = vector.extract_strided_slice %302 {offsets = [0, 0], sizes = [8, 64], strides = [1, 1]} : vector<8x192xf32> to vector<8x64xf32>
    %306 = vector.extract_strided_slice %302 {offsets = [0, 64], sizes = [8, 64], strides = [1, 1]} : vector<8x192xf32> to vector<8x64xf32>
    %307 = vector.extract_strided_slice %302 {offsets = [0, 128], sizes = [8, 64], strides = [1, 1]} : vector<8x192xf32> to vector<8x64xf32>
    %308 = arith.mulf %306, %270 : vector<8x64xf32>
    %309 = arith.mulf %305, %304 : vector<8x64xf32>
    %310 = arith.addf %308, %309 : vector<8x64xf32>
    %311 = math.tanh %310 : vector<8x64xf32>
    %312 = arith.mulf %307, %311 : vector<8x64xf32>
    %313 = tpu.concatenate %312, %292 in 1 : vector<8x64xf32>, vector<8x64xf32> -> vector<8x128xf32>
    %cst_35 = arith.constant dense<0.000000e+00> : vector<8x512xf32>
    %314 = tpu.matmul %313, %8, %cst_35 {dimension_numbers = #tpu.dot_dimension_numbers<[1], [0], [0], [1], [0, 0, 1, 1], [], []>} : vector<8x128xf32>, vector<128x512xf32>, vector<8x512xf32> -> vector<8x512xf32>
    %315 = vector.extract_strided_slice %314 {offsets = [0, 256], sizes = [8, 256], strides = [1, 1]} : vector<8x512xf32> to vector<8x256xf32>
    %316 = arith.addf %315, %11 : vector<8x256xf32>
    %317 = vector.extract_strided_slice %316 {offsets = [0, 0], sizes = [8, 192], strides = [1, 1]} : vector<8x256xf32> to vector<8x192xf32>
    %318 = arith.negf %317 : vector<8x192xf32>
    %319 = math.exp %318 : vector<8x192xf32>
    %cst_36 = arith.constant 1.000000e+00 : f32
    %320 = vector.broadcast %cst_36 : f32 to vector<8x192xf32>
    %321 = arith.addf %320, %319 : vector<8x192xf32>
    %322 = arith.divf %320, %321 : vector<8x192xf32>
    %323 = vector.extract_strided_slice %316 {offsets = [0, 192], sizes = [8, 64], strides = [1, 1]} : vector<8x256xf32> to vector<8x64xf32>
    %324 = math.tanh %323 : vector<8x64xf32>
    %325 = vector.extract_strided_slice %322 {offsets = [0, 0], sizes = [8, 64], strides = [1, 1]} : vector<8x192xf32> to vector<8x64xf32>
    %326 = vector.extract_strided_slice %322 {offsets = [0, 64], sizes = [8, 64], strides = [1, 1]} : vector<8x192xf32> to vector<8x64xf32>
    %327 = vector.extract_strided_slice %322 {offsets = [0, 128], sizes = [8, 64], strides = [1, 1]} : vector<8x192xf32> to vector<8x64xf32>
    %328 = arith.mulf %326, %290 : vector<8x64xf32>
    %329 = arith.mulf %325, %324 : vector<8x64xf32>
    %330 = arith.addf %328, %329 : vector<8x64xf32>
    %331 = math.tanh %330 : vector<8x64xf32>
    %332 = arith.mulf %327, %331 : vector<8x64xf32>
    %c0_37 = arith.constant 0 : index
    %c0_38 = arith.constant 0 : index
    %333 = vector.load %arg6[%c0_37, %c0_38] : memref<64x128xf32, #tpu.memory_space<vmem>>, vector<64x128xf32>
    %cst_39 = arith.constant dense<0.000000e+00> : vector<8x128xf32>
    %334 = tpu.matmul %332, %333, %cst_39 {dimension_numbers = #tpu.dot_dimension_numbers<[1], [0], [0], [1], [0, 0, 1, 1], [], []>} : vector<8x64xf32>, vector<64x128xf32>, vector<8x128xf32> -> vector<8x128xf32>
    %c0_40 = arith.constant 0 : index
    %c0_41 = arith.constant 0 : index
    %335 = vector.load %arg7[%c0_40, %c0_41] : memref<1x128xf32, #tpu.memory_space<vmem>>, vector<1x128xf32>
    %336 = vector.broadcast %335 : vector<1x128xf32> to vector<8x128xf32>
    %337 = arith.addf %334, %336 : vector<8x128xf32>
    %c0_42 = arith.constant 0 : index
    %c0_43 = arith.constant 0 : index
    %338 = vector.load %arg8[%c0_42, %c0_43] : memref<8x128xf32, #tpu.memory_space<vmem>>, vector<8x128xf32>
    tpu.vector_store %arg8[%c0_42, %c0_43], %337 {strides = array<i32>} : memref<8x128xf32, #tpu.memory_space<vmem>>, vector<8x128xf32>,
    return
  }
  func.func @transform_0(%arg0: i32) -> (i32, i32, i32) {
    %c0_i32 = arith.constant 0 : i32
    %c0_i32_0 = arith.constant 0 : i32
    %c0_i32_1 = arith.constant 0 : i32
    return %c0_i32, %arg0, %c0_i32_0 : i32, i32, i32
  }
  func.func @transform_1(%arg0: i32) -> (i32, i32) {
    %c0_i32 = arith.constant 0 : i32
    %c0_i32_0 = arith.constant 0 : i32
    %c0_i32_1 = arith.constant 0 : i32
    return %c0_i32, %c0_i32_0 : i32, i32
  }
  func.func @transform_2(%arg0: i32) -> (i32, i32) {
    %c0_i32 = arith.constant 0 : i32
    %c0_i32_0 = arith.constant 0 : i32
    %c0_i32_1 = arith.constant 0 : i32
    return %c0_i32, %c0_i32_0 : i32, i32
  }
  func.func @transform_3(%arg0: i32) -> (i32, i32) {
    %c0_i32 = arith.constant 0 : i32
    %c0_i32_0 = arith.constant 0 : i32
    %c0_i32_1 = arith.constant 0 : i32
    return %c0_i32, %c0_i32_0 : i32, i32
  }
  func.func @transform_4(%arg0: i32) -> (i32, i32) {
    %c0_i32 = arith.constant 0 : i32
    %c0_i32_0 = arith.constant 0 : i32
    %c0_i32_1 = arith.constant 0 : i32
    return %c0_i32, %c0_i32_0 : i32, i32
  }
  func.func @transform_5(%arg0: i32) -> (i32, i32) {
    %c0_i32 = arith.constant 0 : i32
    %c0_i32_0 = arith.constant 0 : i32
    %c0_i32_1 = arith.constant 0 : i32
    return %c0_i32, %c0_i32_0 : i32, i32
  }
  func.func @transform_6(%arg0: i32) -> (i32, i32) {
    %c0_i32 = arith.constant 0 : i32
    %c0_i32_0 = arith.constant 0 : i32
    %c0_i32_1 = arith.constant 0 : i32
    return %c0_i32, %c0_i32_0 : i32, i32
  }
  func.func @transform_7(%arg0: i32) -> (i32, i32) {
    %c0_i32 = arith.constant 0 : i32
    %c0_i32_0 = arith.constant 0 : i32
    return %arg0, %c0_i32 : i32, i32
  }
}

</mosaic_0001>

<llo_original>
// kernel: tpu_custom_call.1
$region0: #{tpu_custom_call.1}
  #allocation0 [shape = 'u32[]', space=smem, size = 0x4, offset = 0x4, fixed_abs, tag = 'smem constant byte address 0x4 - core index']
  #allocation1 [shape = 'u32[144,128]{1,0:T(1,128)}', space=vmem, size = 0x12000, scoped, tag = 'internal scratch']
  %s0 = inlined_call_operand.hbm [shape: f32[8,8,128], index: 0, kind: input, shape index: {}]
  %s1 = inlined_call_operand.hbm [shape: f32[128,256], index: 1, kind: input, shape index: {}]
  %s2 = inlined_call_operand.hbm [shape: f32[128,512], index: 2, kind: input, shape index: {}]
  %s3 = inlined_call_operand.vmem [shape: f32[1,256], index: 3, kind: input, shape index: {}]
  %s4 = inlined_call_operand.vmem [shape: f32[1,256], index: 4, kind: input, shape index: {}]
  %s5 = inlined_call_operand.hbm [shape: f32[64,128], index: 5, kind: input, shape index: {}]
  %s6 = inlined_call_operand.vmem [shape: f32[1,128], index: 6, kind: input, shape index: {}]
  %s7 = inlined_call_operand.hbm [shape: f32[8,128], index: 7, kind: output, shape index: {}]
  %s8 = sld [smem:[#allocation0]]
  $region54: #{tpu_custom_call.1} parent=0
    _
  %s10 = ssub.s32 1, %s8
  %s11 = scalar_select 0, %s10, %s8
  $region1: #{tpu_custom_call.1} parent=0
    #allocation2 [shape = 'u8[32768]{0}', space=vmem, size = 0x8000, scoped, tag = 'input window, operand 0, single buffered']
    #allocation3 [shape = 's32[1]{0}', space=sflag, size = 0x4, scoped, tag = 'scoped memory for tpu_custom_call.1']
    #allocation4 [shape = 's32[1]{0}', space=sflag, size = 0x4, scoped, tag = 'scoped memory for tpu_custom_call.1']
    #allocation5 [shape = 'u8[131072]{0}', space=vmem, size = 0x20000, scoped, tag = 'input window, operand 1, single buffered']
    #allocation6 [shape = 's32[1]{0}', space=sflag, size = 0x4, scoped, tag = 'scoped memory for tpu_custom_call.1']
    #allocation7 [shape = 'u8[262144]{0}', space=vmem, size = 0x40000, scoped, tag = 'input window, operand 2, single buffered']
    #allocation8 [shape = 'u8[32768]{0}', space=vmem, size = 0x8000, scoped, tag = 'input window, operand 5, single buffered']
    #allocation9 [shape = 's32[1]{0}', space=sflag, size = 0x4, scoped, tag = 'scoped memory for tpu_custom_call.1']
    #allocation10 [shape = 'u8[4096]{0}', space=vmem, size = 0x1000, scoped, tag = 'output window, operand 0, single buffered']
    %12 = vsyncpa [#allocation3], 0
    %13 = vsyncpa [#allocation6], 0
    %14 = vsyncpa [#allocation9], 0
    %15 = vsyncpa [#allocation4], 0
    // Predicated region
    $region2: #{tpu_custom_call.1} parent=1 // pred_check
      _
    $region3: #{tpu_custom_call.1} parent=1 // pred_check_branch
      %17 = sbr.rel (0) target = $region5
    $region4: #{tpu_custom_call.1} parent=1 // pred_region
      %s19 = ssub.s32 1024, 1024
      %20 = vsyncadd [#allocation3], %s19
      %s21 = sshll.u32 [#allocation2], 4
      %s22 = int_to_ptr.vmem [resolvable:$true] %s21
      %27 = dma.hbm_to_vmem [thread:$0]  %s0, 1024, %s22, [#allocation3], 128, 128, 8
    $region5: #{tpu_custom_call.1} parent=1 // pred_fallthru
      _
    // Predicated region
    $region6: #{tpu_custom_call.1} parent=1 // pred_check
      _
    $region7: #{tpu_custom_call.1} parent=1 // pred_check_branch
      %29 = sbr.rel (0) target = $region9
    $region8: #{tpu_custom_call.1} parent=1 // pred_region
      %s31 = ssub.s32 4096, 4096
      %32 = vsyncadd [#allocation6], %s31
      %s33 = sshll.u32 [#allocation5], 4
      %s34 = int_to_ptr.vmem [resolvable:$true] %s33
      %39 = dma.hbm_to_vmem [thread:$0]  %s1, 4096, %s34, [#allocation6], 256, 256, 16
    $region9: #{tpu_custom_call.1} parent=1 // pred_fallthru
      _
    // Predicated region
    $region10: #{tpu_custom_call.1} parent=1 // pred_check
      _
    $region11: #{tpu_custom_call.1} parent=1 // pred_check_branch
      %41 = sbr.rel (0) target = $region13
    $region12: #{tpu_custom_call.1} parent=1 // pred_region
      %s43 = ssub.s32 8192, 8192
      %44 = vsyncadd [#allocation6], %s43
      %s45 = sshll.u32 [#allocation7], 4
      %s46 = int_to_ptr.vmem [resolvable:$true] %s45
      %51 = dma.hbm_to_vmem [thread:$0]  %s2, 8192, %s46, [#allocation6], 512, 512, 32
    $region13: #{tpu_custom_call.1} parent=1 // pred_fallthru
      _
    // Predicated region
    $region14: #{tpu_custom_call.1} parent=1 // pred_check
      _
    $region15: #{tpu_custom_call.1} parent=1 // pred_check_branch
      %53 = sbr.rel (0) target = $region17
    $region16: #{tpu_custom_call.1} parent=1 // pred_region
      _
    $region17: #{tpu_custom_call.1} parent=1 // pred_fallthru
      _
    // Predicated region
    $region18: #{tpu_custom_call.1} parent=1 // pred_check
      _
    $region19: #{tpu_custom_call.1} parent=1 // pred_check_branch
      %55 = sbr.rel (0) target = $region21
    $region20: #{tpu_custom_call.1} parent=1 // pred_region
      _
    $region21: #{tpu_custom_call.1} parent=1 // pred_fallthru
      _
    // Predicated region
    $region22: #{tpu_custom_call.1} parent=1 // pred_check
      _
    $region23: #{tpu_custom_call.1} parent=1 // pred_check_branch
      %57 = sbr.rel (0) target = $region25
    $region24: #{tpu_custom_call.1} parent=1 // pred_region
      %s59 = ssub.s32 1024, 1024
      %60 = vsyncadd [#allocation9], %s59
      %s61 = sshll.u32 [#allocation8], 4
      %s62 = int_to_ptr.vmem [resolvable:$true] %s61
      %67 = dma.hbm_to_vmem [thread:$0]  %s5, 1024, %s62, [#allocation9], 128, 128, 8
    $region25: #{tpu_custom_call.1} parent=1 // pred_fallthru
      _
    // Predicated region
    $region26: #{tpu_custom_call.1} parent=1 // pred_check
      _
    $region27: #{tpu_custom_call.1} parent=1 // pred_check_branch
      %69 = sbr.rel (0) target = $region29
    $region28: #{tpu_custom_call.1} parent=1 // pred_region
      _
    $region29: #{tpu_custom_call.1} parent=1 // pred_fallthru
      _
    // Predicated region
    $region30: #{tpu_custom_call.1} parent=1 // pred_check
      _
    $region31: #{tpu_custom_call.1} parent=1 // pred_check_branch
      %71 = sbr.rel (0) target = $region33
    $region32: #{tpu_custom_call.1} parent=1 // pred_region
      %72 = dma.done [#allocation3], 1024
    $region33: #{tpu_custom_call.1} parent=1 // pred_fallthru
      _
    // Predicated region
    $region34: #{tpu_custom_call.1} parent=1 // pred_check
      _
    $region35: #{tpu_custom_call.1} parent=1 // pred_check_branch
      %74 = sbr.rel (0) target = $region37
    $region36: #{tpu_custom_call.1} parent=1 // pred_region
      %75 = dma.done [#allocation6], 4096
    $region37: #{tpu_custom_call.1} parent=1 // pred_fallthru
      _
    // Predicated region
    $region38: #{tpu_custom_call.1} parent=1 // pred_check
      _
    $region39: #{tpu_custom_call.1} parent=1 // pred_check_branch
      %77 = sbr.rel (0) target = $region41
    $region40: #{tpu_custom_call.1} parent=1 // pred_region
      %78 = dma.done [#allocation6], 8192
    $region41: #{tpu_custom_call.1} parent=1 // pred_fallthru
      _
    // Predicated region
    $region42: #{tpu_custom_call.1} parent=1 // pred_check
      _
    $region43: #{tpu_custom_call.1} parent=1 // pred_check_branch
      %80 = sbr.rel (0) target = $region45
    $region44: #{tpu_custom_call.1} parent=1 // pred_region
      %81 = dma.done [#allocation9], 1024
    $region45: #{tpu_custom_call.1} parent=1 // pred_fallthru
      _
    %v82 = vld [vmem:[#allocation2] sm:$0xff]
    %v83 = vld [vmem:[#allocation2 + $0x8] sm:$0xff]
    %v84 = vld [vmem:[#allocation2 + $0x10] sm:$0xff]
    %v85 = vld [vmem:[#allocation2 + $0x18] sm:$0xff]
    %v86 = vld [vmem:[#allocation2 + $0x20] sm:$0xff]
    %v87 = vld [vmem:[#allocation2 + $0x28] sm:$0xff]
    %v88 = vld [vmem:[#allocation2 + $0x30] sm:$0xff]
    %v89 = vld [vmem:[#allocation2 + $0x38] sm:$0xff]
    %v90 = vld [vmem:[#allocation5] sm:$0xff]
    %v91 = vld [vmem:[#allocation5 + $0x8] sm:$0xff]
    %v92 = vld [vmem:[#allocation5 + $0x10] sm:$0xff]
    %v93 = vld [vmem:[#allocation5 + $0x18] sm:$0xff]
    %v94 = vld [vmem:[#allocation5 + $0x20] sm:$0xff]
    %v95 = vld [vmem:[#allocation5 + $0x28] sm:$0xff]
    %v96 = vld [vmem:[#allocation5 + $0x30] sm:$0xff]
    %v97 = vld [vmem:[#allocation5 + $0x38] sm:$0xff]
    %v98 = vld [vmem:[#allocation5 + $0x40] sm:$0xff]
    %v99 = vld [vmem:[#allocation5 + $0x48] sm:$0xff]
    %v100 = vld [vmem:[#allocation5 + $0x50] sm:$0xff]
    %v101 = vld [vmem:[#allocation5 + $0x58] sm:$0xff]
    %v102 = vld [vmem:[#allocation5 + $0x60] sm:$0xff]
    %v103 = vld [vmem:[#allocation5 + $0x68] sm:$0xff]
    %v104 = vld [vmem:[#allocation5 + $0x70] sm:$0xff]
    %v105 = vld [vmem:[#allocation5 + $0x78] sm:$0xff]
    %v106 = vld [vmem:[#allocation5 + $0x80] sm:$0xff]
    %v107 = vld [vmem:[#allocation5 + $0x88] sm:$0xff]
    %v108 = vld [vmem:[#allocation5 + $0x90] sm:$0xff]
    %v109 = vld [vmem:[#allocation5 + $0x98] sm:$0xff]
    %v110 = vld [vmem:[#allocation5 + $0xa0] sm:$0xff]
    %v111 = vld [vmem:[#allocation5 + $0xa8] sm:$0xff]
    %v112 = vld [vmem:[#allocation5 + $0xb0] sm:$0xff]
    %v113 = vld [vmem:[#allocation5 + $0xb8] sm:$0xff]
    %v114 = vld [vmem:[#allocation5 + $0xc0] sm:$0xff]
    %v115 = vld [vmem:[#allocation5 + $0xc8] sm:$0xff]
    %v116 = vld [vmem:[#allocation5 + $0xd0] sm:$0xff]
    %v117 = vld [vmem:[#allocation5 + $0xd8] sm:$0xff]
    %v118 = vld [vmem:[#allocation5 + $0xe0] sm:$0xff]
    %v119 = vld [vmem:[#allocation5 + $0xe8] sm:$0xff]
    %v120 = vld [vmem:[#allocation5 + $0xf0] sm:$0xff]
    %v121 = vld [vmem:[#allocation5 + $0xf8] sm:$0xff]
    %v122 = vld [vmem:[%s3] sm:$0x3]
    %v124 = vlaneseq
    %v125 = vshrl.u32 %v124, 7
    %v126 = vsub.s32 0, %v125
    %v127 = vrot.slane %v122, %v126
    %v128 = vlaneseq
    %v129 = vshrl.u32 %v128, 7
    %v130 = vsub.s32 1, %v129
    %v131 = vrot.slane %v122, %v130
    %134 = vmatprep.subr.mxu0 %v91
    %135 = vmatpush1.msra.mxu0 %v90
    %136 = vmatprep.subr.mxu0 %v93
    %137 = vmatpush1.msra.mxu0 %v92
    %138 = vmatprep.subr.mxu0 %v95
    %139 = vmatpush1.msra.mxu0 %v94
    %140 = vmatprep.subr.mxu0 %v97
    %141 = vmatpush1.msra.mxu0 %v96
    %142 = vmatprep.subr.mxu0 %v99
    %143 = vmatpush1.msra.mxu0 %v98
    %144 = vmatprep.subr.mxu0 %v101
    %145 = vmatpush1.msra.mxu0 %v100
    %146 = vmatprep.subr.mxu0 %v103
    %147 = vmatpush1.msra.mxu0 %v102
    %148 = vmatprep.subr.mxu0 %v105
    %149 = vmatpush1.msra.mxu0 %v104
    %150 = vmatprep.subr.mxu0 %v107
    %151 = vmatpush1.msra.mxu0 %v106
    %152 = vmatprep.subr.mxu0 %v109
    %153 = vmatpush1.msra.mxu0 %v108
    %154 = vmatprep.subr.mxu0 %v111
    %155 = vmatpush1.msra.mxu0 %v110
    %156 = vmatprep.subr.mxu0 %v113
    %157 = vmatpush1.msra.mxu0 %v112
    %158 = vmatprep.subr.mxu0 %v115
    %159 = vmatpush1.msra.mxu0 %v114
    %160 = vmatprep.subr.mxu0 %v117
    %161 = vmatpush1.msra.mxu0 %v116
    %162 = vmatprep.subr.mxu0 %v119
    %163 = vmatpush1.msra.mxu0 %v118
    %164 = vmatprep.subr.mxu0 %v121
    %165 = vmatpush1.msra.mxu0 %v120
    %166 = vmatprep.subr.mxu0 0.0
    %167 = vmatpush1.msra.mxu0 0.0
    %168 = vmatprep.subr.mxu0 0.0
    %169 = vmatpush1.msra.mxu0 0.0
    %170 = vmatprep.subr.mxu0 0.0
    %171 = vmatpush1.msra.mxu0 0.0
    %172 = vmatprep.subr.mxu0 0.0
    %173 = vmatpush1.msra.mxu0 0.0
    %174 = vmatprep.subr.mxu0 0.0
    %175 = vmatpush1.msra.mxu0 0.0
    %176 = vmatprep.subr.mxu0 0.0
    %177 = vmatpush1.msra.mxu0 0.0
    %178 = vmatprep.subr.mxu0 0.0
    %179 = vmatpush1.msra.mxu0 0.0
    %180 = vmatprep.subr.mxu0 0.0
    %181 = vmatpush1.msra.mxu0 0.0
    %182 = vmatprep.subr.mxu0 0.0
    %183 = vmatpush1.msra.mxu0 0.0
    %184 = vmatprep.subr.mxu0 0.0
    %185 = vmatpush1.msra.mxu0 0.0
    %186 = vmatprep.subr.mxu0 0.0
    %187 = vmatpush1.msra.mxu0 0.0
    %188 = vmatprep.subr.mxu0 0.0
    %189 = vmatpush1.msra.mxu0 0.0
    %190 = vmatprep.subr.mxu0 0.0
    %191 = vmatpush1.msra.mxu0 0.0
    %192 = vmatprep.subr.mxu0 0.0
    %193 = vmatpush1.msra.mxu0 0.0
    %194 = vmatprep.subr.mxu0 0.0
    %195 = vmatpush1.msra.mxu0 0.0
    %196 = vmatprep.subr.mxu0 0.0
    %197 = vmatpush1.msra.mxu0 0.0
    %198 = vmatprep.mubr.f32.mxu0 0.0
    %199 = vmatmul.mubr.f32.gmra.mrb[0].mxu0 %v82
    %v200 = vpop.f32.mrb[0].mxu0
    %v201 = vadd.f32 %v127, %v200
    %v202 = vpop.f32.mrb[0].mxu0
    %v203 = vadd.f32 %v131, %v202
    %204 = vmatprep.mubr.f32.mxu0 0.0
    %205 = vmatmul.mubr.f32.gmra.mrb[0].mxu0 %v83
    %v206 = vpop.f32.mrb[0].mxu0
    %v207 = vadd.f32 %v127, %v206
    %v208 = vpop.f32.mrb[0].mxu0
    %v209 = vadd.f32 %v131, %v208
    %210 = vmatprep.mubr.f32.mxu0 0.0
    %211 = vmatmul.mubr.f32.gmra.mrb[0].mxu0 %v84
    %v212 = vpop.f32.mrb[0].mxu0
    %v213 = vadd.f32 %v127, %v212
    %v214 = vpop.f32.mrb[0].mxu0
    %v215 = vadd.f32 %v131, %v214
    %216 = vmatprep.mubr.f32.mxu0 0.0
    %217 = vmatmul.mubr.f32.gmra.mrb[0].mxu0 %v85
    %v218 = vpop.f32.mrb[0].mxu0
    %v219 = vadd.f32 %v127, %v218
    %v220 = vpop.f32.mrb[0].mxu0
    %v221 = vadd.f32 %v131, %v220
    %222 = vmatprep.mubr.f32.mxu0 0.0
    %223 = vmatmul.mubr.f32.gmra.mrb[0].mxu0 %v86
    %v224 = vpop.f32.mrb[0].mxu0
    %v225 = vadd.f32 %v127, %v224
    %v226 = vpop.f32.mrb[0].mxu0
    %v227 = vadd.f32 %v131, %v226
    %228 = vmatprep.mubr.f32.mxu0 0.0
    %229 = vmatmul.mubr.f32.gmra.mrb[0].mxu0 %v87
    %v230 = vpop.f32.mrb[0].mxu0
    %v231 = vadd.f32 %v127, %v230
    %v232 = vpop.f32.mrb[0].mxu0
    %v233 = vadd.f32 %v131, %v232
    %234 = vmatprep.mubr.f32.mxu0 0.0
    %235 = vmatmul.mubr.f32.gmra.mrb[0].mxu0 %v88
    %v236 = vpop.f32.mrb[0].mxu0
    %v237 = vadd.f32 %v127, %v236
    %v238 = vpop.f32.mrb[0].mxu0
    %v239 = vadd.f32 %v131, %v238
    %240 = vmatprep.mubr.f32.mxu0 0.0
    %241 = vmatmul.mubr.f32.gmra.mrb[0].mxu0 %v89
    %v242 = vpop.f32.mrb[0].mxu0
    %v243 = vadd.f32 %v127, %v242
    %v244 = vpop.f32.mrb[0].mxu0
    %v245 = vadd.f32 %v131, %v244
    %246 = vdwg.mxu0
    %v247 = vld [vmem:[#allocation7] sm:$0xff]
    %v248 = vld [vmem:[#allocation7 + $0x8] sm:$0xff]
    %v249 = vld [vmem:[#allocation7 + $0x10] sm:$0xff]
    %v250 = vld [vmem:[#allocation7 + $0x18] sm:$0xff]
    %v251 = vld [vmem:[#allocation7 + $0x20] sm:$0xff]
    %v252 = vld [vmem:[#allocation7 + $0x28] sm:$0xff]
    %v253 = vld [vmem:[#allocation7 + $0x30] sm:$0xff]
    %v254 = vld [vmem:[#allocation7 + $0x38] sm:$0xff]
    %v255 = vld [vmem:[#allocation7 + $0x40] sm:$0xff]
    %v256 = vld [vmem:[#allocation7 + $0x48] sm:$0xff]
    %v257 = vld [vmem:[#allocation7 + $0x50] sm:$0xff]
    %v258 = vld [vmem:[#allocation7 + $0x58] sm:$0xff]
    %v259 = vld [vmem:[#allocation7 + $0x60] sm:$0xff]
    %v260 = vld [vmem:[#allocation7 + $0x68] sm:$0xff]
    %v261 = vld [vmem:[#allocation7 + $0x70] sm:$0xff]
    %v262 = vld [vmem:[#allocation7 + $0x78] sm:$0xff]
    %v263 = vld [vmem:[#allocation7 + $0x80] sm:$0xff]
    %v264 = vld [vmem:[#allocation7 + $0x88] sm:$0xff]
    %v265 = vld [vmem:[#allocation7 + $0x90] sm:$0xff]
    %v266 = vld [vmem:[#allocation7 + $0x98] sm:$0xff]
    %v267 = vld [vmem:[#allocation7 + $0xa0] sm:$0xff]
    %v268 = vld [vmem:[#allocation7 + $0xa8] sm:$0xff]
    %v269 = vld [vmem:[#allocation7 + $0xb0] sm:$0xff]
    %v270 = vld [vmem:[#allocation7 + $0xb8] sm:$0xff]
    %v271 = vld [vmem:[#allocation7 + $0xc0] sm:$0xff]
    %v272 = vld [vmem:[#allocation7 + $0xc8] sm:$0xff]
    %v273 = vld [vmem:[#allocation7 + $0xd0] sm:$0xff]
    %v274 = vld [vmem:[#allocation7 + $0xd8] sm:$0xff]
    %v275 = vld [vmem:[#allocation7 + $0xe0] sm:$0xff]
    %v276 = vld [vmem:[#allocation7 + $0xe8] sm:$0xff]
    %v277 = vld [vmem:[#allocation7 + $0xf0] sm:$0xff]
    %v278 = vld [vmem:[#allocation7 + $0xf8] sm:$0xff]
    %v279 = vld [vmem:[#allocation7 + $0x100] sm:$0xff]
    %v280 = vld [vmem:[#allocation7 + $0x108] sm:$0xff]
    %v281 = vld [vmem:[#allocation7 + $0x110] sm:$0xff]
    %v282 = vld [vmem:[#allocation7 + $0x118] sm:$0xff]
    %v283 = vld [vmem:[#allocation7 + $0x120] sm:$0xff]
    %v284 = vld [vmem:[#allocation7 + $0x128] sm:$0xff]
    %v285 = vld [vmem:[#allocation7 + $0x130] sm:$0xff]
    %v286 = vld [vmem:[#allocation7 + $0x138] sm:$0xff]
    %v287 = vld [vmem:[#allocation7 + $0x140] sm:$0xff]
    %v288 = vld [vmem:[#allocation7 + $0x148] sm:$0xff]
    %v289 = vld [vmem:[#allocation7 + $0x150] sm:$0xff]
    %v290 = vld [vmem:[#allocation7 + $0x158] sm:$0xff]
    %v291 = vld [vmem:[#allocation7 + $0x160] sm:$0xff]
    %v292 = vld [vmem:[#allocation7 + $0x168] sm:$0xff]
    %v293 = vld [vmem:[#allocation7 + $0x170] sm:$0xff]
    %v294 = vld [vmem:[#allocation7 + $0x178] sm:$0xff]
    %v295 = vld [vmem:[#allocation7 + $0x180] sm:$0xff]
    %v296 = vld [vmem:[#allocation7 + $0x188] sm:$0xff]
    %v297 = vld [vmem:[#allocation7 + $0x190] sm:$0xff]
    %v298 = vld [vmem:[#allocation7 + $0x198] sm:$0xff]
    %v299 = vld [vmem:[#allocation7 + $0x1a0] sm:$0xff]
    %v300 = vld [vmem:[#allocation7 + $0x1a8] sm:$0xff]
    %v301 = vld [vmem:[#allocation7 + $0x1b0] sm:$0xff]
    %v302 = vld [vmem:[#allocation7 + $0x1b8] sm:$0xff]
    %v303 = vld [vmem:[#allocation7 + $0x1c0] sm:$0xff]
    %v304 = vld [vmem:[#allocation7 + $0x1c8] sm:$0xff]
    %v305 = vld [vmem:[#allocation7 + $0x1d0] sm:$0xff]
    %v306 = vld [vmem:[#allocation7 + $0x1d8] sm:$0xff]
    %v307 = vld [vmem:[#allocation7 + $0x1e0] sm:$0xff]
    %v308 = vld [vmem:[#allocation7 + $0x1e8] sm:$0xff]
    %v309 = vld [vmem:[#allocation7 + $0x1f0] sm:$0xff]
    %v310 = vld [vmem:[#allocation7 + $0x1f8] sm:$0xff]
    %v311 = vld [vmem:[%s4] sm:$0x3]
    %v313 = vlaneseq
    %v314 = vshrl.u32 %v313, 7
    %v315 = vsub.s32 0, %v314
    %v316 = vrot.slane %v311, %v315
    %v317 = vlaneseq
    %v318 = vshrl.u32 %v317, 7
    %v319 = vsub.s32 1, %v318
    %v320 = vrot.slane %v311, %v319
    %v323 = vxor.u32 %v201, 2147483648
    %v324 = vxor.u32 %v203, 2147483648
    %v325 = vmul.f32 %v323, 1.442695
    %v326 = vpow.pop %v325
    %v327 = vmul.f32 %v324, 1.442695
    %v328 = vpow.pop %v327
    %v329 = vadd.f32 %v326, 1.0
    %v330 = vadd.f32 %v328, 1.0
    %v331 = vrcp.pop %v329
    %v332 = vmul.f32 1.0, %v331
    %v333 = vrcp.pop %v330
    %v334 = vmul.f32 1.0, %v333
    %v335 = vtanh.pop %v203
    %v336 = vmul.f32 %v332, 0.0
    %338 = vrot.lane.b32.xlu0 %v335, 64
    %v339 = vpop.permute.xlu0 %338
    %v341 = vmul.f32 %v332, %v339
    %343 = vrot.lane.b32.xlu0 %v341, 64
    %v344 = vpop.permute.xlu0 %343
    %v346 = vadd.f32 %v336, %v344
    %v347 = vtanh.pop %v346
    %349 = vrot.lane.b32.xlu0 %v347, 64
    %v350 = vpop.permute.xlu0 %349
    %v352 = vmul.f32 %v334, %v350
    %vm353 = vcmask 523264
    %v354 = vsel %vm353, %v352, 0.0
    %355 = vmatprep.subr.mxu0 %v248
    %356 = vmatpush1.msra.mxu0 %v247
    %357 = vmatprep.subr.mxu0 %v252
    %358 = vmatpush1.msra.mxu0 %v251
    %359 = vmatprep.subr.mxu0 %v256
    %360 = vmatpush1.msra.mxu0 %v255
    %361 = vmatprep.subr.mxu0 %v260
    %362 = vmatpush1.msra.mxu0 %v259
    %363 = vmatprep.subr.mxu0 %v264
    %364 = vmatpush1.msra.mxu0 %v263
    %365 = vmatprep.subr.mxu0 %v268
    %366 = vmatpush1.msra.mxu0 %v267
    %367 = vmatprep.subr.mxu0 %v272
    %368 = vmatpush1.msra.mxu0 %v271
    %369 = vmatprep.subr.mxu0 %v276
    %370 = vmatpush1.msra.mxu0 %v275
    %371 = vmatprep.subr.mxu0 %v280
    %372 = vmatpush1.msra.mxu0 %v279
    %373 = vmatprep.subr.mxu0 %v284
    %374 = vmatpush1.msra.mxu0 %v283
    %375 = vmatprep.subr.mxu0 %v288
    %376 = vmatpush1.msra.mxu0 %v287
    %377 = vmatprep.subr.mxu0 %v292
    %378 = vmatpush1.msra.mxu0 %v291
    %379 = vmatprep.subr.mxu0 %v296
    %380 = vmatpush1.msra.mxu0 %v295
    %381 = vmatprep.subr.mxu0 %v300
    %382 = vmatpush1.msra.mxu0 %v299
    %383 = vmatprep.subr.mxu0 %v304
    %384 = vmatpush1.msra.mxu0 %v303
    %385 = vmatprep.subr.mxu0 %v308
    %386 = vmatpush1.msra.mxu0 %v307
    %387 = vmatprep.subr.mxu0 0.0
    %388 = vmatpush1.msra.mxu0 0.0
    %389 = vmatprep.subr.mxu0 0.0
    %390 = vmatpush1.msra.mxu0 0.0
    %391 = vmatprep.subr.mxu0 0.0
    %392 = vmatpush1.msra.mxu0 0.0
    %393 = vmatprep.subr.mxu0 0.0
    %394 = vmatpush1.msra.mxu0 0.0
    %395 = vmatprep.subr.mxu0 0.0
    %396 = vmatpush1.msra.mxu0 0.0
    %397 = vmatprep.subr.mxu0 0.0
    %398 = vmatpush1.msra.mxu0 0.0
    %399 = vmatprep.subr.mxu0 0.0
    %400 = vmatpush1.msra.mxu0 0.0
    %401 = vmatprep.subr.mxu0 0.0
    %402 = vmatpush1.msra.mxu0 0.0
    %403 = vmatprep.subr.mxu0 0.0
    %404 = vmatpush1.msra.mxu0 0.0
    %405 = vmatprep.subr.mxu0 0.0
    %406 = vmatpush1.msra.mxu0 0.0
    %407 = vmatprep.subr.mxu0 0.0
    %408 = vmatpush1.msra.mxu0 0.0
    %409 = vmatprep.subr.mxu0 0.0
    %410 = vmatpush1.msra.mxu0 0.0
    %411 = vmatprep.subr.mxu0 0.0
    %412 = vmatpush1.msra.mxu0 0.0
    %413 = vmatprep.subr.mxu0 0.0
    %414 = vmatpush1.msra.mxu0 0.0
    %415 = vmatprep.subr.mxu0 0.0
    %416 = vmatpush1.msra.mxu0 0.0
    %417 = vmatprep.subr.mxu0 0.0
    %418 = vmatpush1.msra.mxu0 0.0
    %419 = vmatprep.mubr.f32.mxu0 0.0
    %420 = vmatmul.mubr.f32.gmra.mrb[0].mxu0 %v354
    %v421 = vpop.f32.mrb[0].mxu0
    %v422 = vadd.f32 0.0, %v421
    %v423 = vpop.f32.mrb[0].mxu0
    %v424 = vadd.f32 0.0, %v423
    %425 = vdwg.mxu0
    %426 = vmatprep.subr.mxu0 %v250
    %427 = vmatpush1.msra.mxu0 %v249
    %428 = vmatprep.subr.mxu0 %v254
    %429 = vmatpush1.msra.mxu0 %v253
    %430 = vmatprep.subr.mxu0 %v258
    %431 = vmatpush1.msra.mxu0 %v257
    %432 = vmatprep.subr.mxu0 %v262
    %433 = vmatpush1.msra.mxu0 %v261
    %434 = vmatprep.subr.mxu0 %v266
    %435 = vmatpush1.msra.mxu0 %v265
    %436 = vmatprep.subr.mxu0 %v270
    %437 = vmatpush1.msra.mxu0 %v269
    %438 = vmatprep.subr.mxu0 %v274
    %439 = vmatpush1.msra.mxu0 %v273
    %440 = vmatprep.subr.mxu0 %v278
    %441 = vmatpush1.msra.mxu0 %v277
    %442 = vmatprep.subr.mxu0 %v282
    %443 = vmatpush1.msra.mxu0 %v281
    %444 = vmatprep.subr.mxu0 %v286
    %445 = vmatpush1.msra.mxu0 %v285
    %446 = vmatprep.subr.mxu0 %v290
    %447 = vmatpush1.msra.mxu0 %v289
    %448 = vmatprep.subr.mxu0 %v294
    %449 = vmatpush1.msra.mxu0 %v293
    %450 = vmatprep.subr.mxu0 %v298
    %451 = vmatpush1.msra.mxu0 %v297
    %452 = vmatprep.subr.mxu0 %v302
    %453 = vmatpush1.msra.mxu0 %v301
    %454 = vmatprep.subr.mxu0 %v306
    %455 = vmatpush1.msra.mxu0 %v305
    %456 = vmatprep.subr.mxu0 %v310
    %457 = vmatpush1.msra.mxu0 %v309
    %458 = vmatprep.subr.mxu0 0.0
    %459 = vmatpush1.msra.mxu0 0.0
    %460 = vmatprep.subr.mxu0 0.0
    %461 = vmatpush1.msra.mxu0 0.0
    %462 = vmatprep.subr.mxu0 0.0
    %463 = vmatpush1.msra.mxu0 0.0
    %464 = vmatprep.subr.mxu0 0.0
    %465 = vmatpush1.msra.mxu0 0.0
    %466 = vmatprep.subr.mxu0 0.0
    %467 = vmatpush1.msra.mxu0 0.0
    %468 = vmatprep.subr.mxu0 0.0
    %469 = vmatpush1.msra.mxu0 0.0
    %470 = vmatprep.subr.mxu0 0.0
    %471 = vmatpush1.msra.mxu0 0.0
    %472 = vmatprep.subr.mxu0 0.0
    %473 = vmatpush1.msra.mxu0 0.0
    %474 = vmatprep.subr.mxu0 0.0
    %475 = vmatpush1.msra.mxu0 0.0
    %476 = vmatprep.subr.mxu0 0.0
    %477 = vmatpush1.msra.mxu0 0.0
    %478 = vmatprep.subr.mxu0 0.0
    %479 = vmatpush1.msra.mxu0 0.0
    %480 = vmatprep.subr.mxu0 0.0
    %481 = vmatpush1.msra.mxu0 0.0
    %482 = vmatprep.subr.mxu0 0.0
    %483 = vmatpush1.msra.mxu0 0.0
    %484 = vmatprep.subr.mxu0 0.0
    %485 = vmatpush1.msra.mxu0 0.0
    %486 = vmatprep.subr.mxu0 0.0
    %487 = vmatpush1.msra.mxu0 0.0
    %488 = vmatprep.subr.mxu0 0.0
    %489 = vmatpush1.msra.mxu0 0.0
    %490 = vmatprep.mubr.f32.mxu0 0.0
    %491 = vmatmul.mubr.f32.gmra.mrb[0].mxu0 %v354
    %v492 = vpop.f32.mrb[0].mxu0
    %v493 = vadd.f32 0.0, %v492
    %v494 = vpop.f32.mrb[0].mxu0
    %v495 = vadd.f32 0.0, %v494
    %496 = vdwg.mxu0
    %v497 = vadd.f32 %v493, %v316
    %v498 = vadd.f32 %v495, %v320
    %v499 = vxor.u32 %v497, 2147483648
    %v500 = vxor.u32 %v498, 2147483648
    %v501 = vmul.f32 %v499, 1.442695
    %v502 = vpow.pop %v501
    %v503 = vmul.f32 %v500, 1.442695
    %v504 = vpow.pop %v503
    %v505 = vadd.f32 %v502, 1.0
    %v506 = vadd.f32 %v504, 1.0
    %v507 = vrcp.pop %v505
    %v508 = vmul.f32 1.0, %v507
    %v509 = vrcp.pop %v506
    %v510 = vmul.f32 1.0, %v509
    %v511 = vtanh.pop %v498
    %v512 = vmul.f32 %v508, 0.0
    %514 = vrot.lane.b32.xlu0 %v511, 64
    %v515 = vpop.permute.xlu0 %514
    %v517 = vmul.f32 %v508, %v515
    %519 = vrot.lane.b32.xlu0 %v517, 64
    %v520 = vpop.permute.xlu0 %519
    %v522 = vadd.f32 %v512, %v520
    %v523 = vtanh.pop %v522
    %525 = vrot.lane.b32.xlu0 %v523, 64
    %v526 = vpop.permute.xlu0 %525
    %v528 = vmul.f32 %v510, %v526
    %v529 = vadd.f32 %v207, %v422
    %v530 = vadd.f32 %v209, %v424
    %v531 = vxor.u32 %v529, 2147483648
    %v532 = vxor.u32 %v530, 2147483648
    %v533 = vmul.f32 %v531, 1.442695
    %v534 = vpow.pop %v533
    %v535 = vmul.f32 %v532, 1.442695
    %v536 = vpow.pop %v535
    %v537 = vadd.f32 %v534, 1.0
    %v538 = vadd.f32 %v536, 1.0
    %v539 = vrcp.pop %v537
    %v540 = vmul.f32 1.0, %v539
    %v541 = vrcp.pop %v538
    %v542 = vmul.f32 1.0, %v541
    %v543 = vtanh.pop %v530
    %v544 = vmul.f32 %v540, %v346
    %546 = vrot.lane.b32.xlu0 %v543, 64
    %v547 = vpop.permute.xlu0 %546
    %v549 = vmul.f32 %v540, %v547
    %551 = vrot.lane.b32.xlu0 %v549, 64
    %v552 = vpop.permute.xlu0 %551
    %v554 = vadd.f32 %v544, %v552
    %v555 = vtanh.pop %v554
    %557 = vrot.lane.b32.xlu0 %v555, 64
    %v558 = vpop.permute.xlu0 %557
    %v560 = vmul.f32 %v542, %v558
    %562 = vrot.lane.b32.xlu0 %v528, 64
    %v563 = vpop.permute.xlu0 %562
    %v565 = vsel %vm353, %v560, %v563
    %566 = vmatprep.subr.mxu0 %v248
    %567 = vmatpush1.msra.mxu0 %v247
    %568 = vmatprep.subr.mxu0 %v252
    %569 = vmatpush1.msra.mxu0 %v251
    %570 = vmatprep.subr.mxu0 %v256
    %571 = vmatpush1.msra.mxu0 %v255
    %572 = vmatprep.subr.mxu0 %v260
    %573 = vmatpush1.msra.mxu0 %v259
    %574 = vmatprep.subr.mxu0 %v264
    %575 = vmatpush1.msra.mxu0 %v263
    %576 = vmatprep.subr.mxu0 %v268
    %577 = vmatpush1.msra.mxu0 %v267
    %578 = vmatprep.subr.mxu0 %v272
    %579 = vmatpush1.msra.mxu0 %v271
    %580 = vmatprep.subr.mxu0 %v276
    %581 = vmatpush1.msra.mxu0 %v275
    %582 = vmatprep.subr.mxu0 %v280
    %583 = vmatpush1.msra.mxu0 %v279
    %584 = vmatprep.subr.mxu0 %v284
    %585 = vmatpush1.msra.mxu0 %v283
    %586 = vmatprep.subr.mxu0 %v288
    %587 = vmatpush1.msra.mxu0 %v287
    %588 = vmatprep.subr.mxu0 %v292
    %589 = vmatpush1.msra.mxu0 %v291
    %590 = vmatprep.subr.mxu0 %v296
    %591 = vmatpush1.msra.mxu0 %v295
    %592 = vmatprep.subr.mxu0 %v300
    %593 = vmatpush1.msra.mxu0 %v299
    %594 = vmatprep.subr.mxu0 %v304
    %595 = vmatpush1.msra.mxu0 %v303
    %596 = vmatprep.subr.mxu0 %v308
    %597 = vmatpush1.msra.mxu0 %v307
    %598 = vmatprep.subr.mxu0 0.0
    %599 = vmatpush1.msra.mxu0 0.0
    %600 = vmatprep.subr.mxu0 0.0
    %601 = vmatpush1.msra.mxu0 0.0
    %602 = vmatprep.subr.mxu0 0.0
    %603 = vmatpush1.msra.mxu0 0.0
    %604 = vmatprep.subr.mxu0 0.0
    %605 = vmatpush1.msra.mxu0 0.0
    %606 = vmatprep.subr.mxu0 0.0
    %607 = vmatpush1.msra.mxu0 0.0
    %608 = vmatprep.subr.mxu0 0.0
    %609 = vmatpush1.msra.mxu0 0.0
    %610 = vmatprep.subr.mxu0 0.0
    %611 = vmatpush1.msra.mxu0 0.0
    %612 = vmatprep.subr.mxu0 0.0
    %613 = vmatpush1.msra.mxu0 0.0
    %614 = vmatprep.subr.mxu0 0.0
    %615 = vmatpush1.msra.mxu0 0.0
    %616 = vmatprep.subr.mxu0 0.0
    %617 = vmatpush1.msra.mxu0 0.0
    %618 = vmatprep.subr.mxu0 0.0
    %619 = vmatpush1.msra.mxu0 0.0
    %620 = vmatprep.subr.mxu0 0.0
    %621 = vmatpush1.msra.mxu0 0.0
    %622 = vmatprep.subr.mxu0 0.0
    %623 = vmatpush1.msra.mxu0 0.0
    %624 = vmatprep.subr.mxu0 0.0
    %625 = vmatpush1.msra.mxu0 0.0
    %626 = vmatprep.subr.mxu0 0.0
    %627 = vmatpush1.msra.mxu0 0.0
    %628 = vmatprep.subr.mxu0 0.0
    %629 = vmatpush1.msra.mxu0 0.0
    %630 = vmatprep.mubr.f32.mxu0 0.0
    %631 = vmatmul.mubr.f32.gmra.mrb[0].mxu0 %v565
    %v632 = vpop.f32.mrb[0].mxu0
    %v633 = vadd.f32 0.0, %v632
    %v634 = vpop.f32.mrb[0].mxu0
    %v635 = vadd.f32 0.0, %v634
    %636 = vdwg.mxu0
    %637 = vmatprep.subr.mxu0 %v250
    %638 = vmatpush1.msra.mxu0 %v249
    %639 = vmatprep.subr.mxu0 %v254
    %640 = vmatpush1.msra.mxu0 %v253
    %641 = vmatprep.subr.mxu0 %v258
    %642 = vmatpush1.msra.mxu0 %v257
    %643 = vmatprep.subr.mxu0 %v262
    %644 = vmatpush1.msra.mxu0 %v261
    %645 = vmatprep.subr.mxu0 %v266
    %646 = vmatpush1.msra.mxu0 %v265
    %647 = vmatprep.subr.mxu0 %v270
    %648 = vmatpush1.msra.mxu0 %v269
    %649 = vmatprep.subr.mxu0 %v274
    %650 = vmatpush1.msra.mxu0 %v273
    %651 = vmatprep.subr.mxu0 %v278
    %652 = vmatpush1.msra.mxu0 %v277
    %653 = vmatprep.subr.mxu0 %v282
    %654 = vmatpush1.msra.mxu0 %v281
    %655 = vmatprep.subr.mxu0 %v286
    %656 = vmatpush1.msra.mxu0 %v285
    %657 = vmatprep.subr.mxu0 %v290
    %658 = vmatpush1.msra.mxu0 %v289
    %659 = vmatprep.subr.mxu0 %v294
    %660 = vmatpush1.msra.mxu0 %v293
    %661 = vmatprep.subr.mxu0 %v298
    %662 = vmatpush1.msra.mxu0 %v297
    %663 = vmatprep.subr.mxu0 %v302
    %664 = vmatpush1.msra.mxu0 %v301
    %665 = vmatprep.subr.mxu0 %v306
    %666 = vmatpush1.msra.mxu0 %v305
    %667 = vmatprep.subr.mxu0 %v310
    %668 = vmatpush1.msra.mxu0 %v309
    %669 = vmatprep.subr.mxu0 0.0
    %670 = vmatpush1.msra.mxu0 0.0
    %671 = vmatprep.subr.mxu0 0.0
    %672 = vmatpush1.msra.mxu0 0.0
    %673 = vmatprep.subr.mxu0 0.0
    %674 = vmatpush1.msra.mxu0 0.0
    %675 = vmatprep.subr.mxu0 0.0
    %676 = vmatpush1.msra.mxu0 0.0
    %677 = vmatprep.subr.mxu0 0.0
    %678 = vmatpush1.msra.mxu0 0.0
    %679 = vmatprep.subr.mxu0 0.0
    %680 = vmatpush1.msra.mxu0 0.0
    %681 = vmatprep.subr.mxu0 0.0
    %682 = vmatpush1.msra.mxu0 0.0
    %683 = vmatprep.subr.mxu0 0.0
    %684 = vmatpush1.msra.mxu0 0.0
    %685 = vmatprep.subr.mxu0 0.0
    %686 = vmatpush1.msra.mxu0 0.0
    %687 = vmatprep.subr.mxu0 0.0
    %688 = vmatpush1.msra.mxu0 0.0
    %689 = vmatprep.subr.mxu0 0.0
    %690 = vmatpush1.msra.mxu0 0.0
    %691 = vmatprep.subr.mxu0 0.0
    %692 = vmatpush1.msra.mxu0 0.0
    %693 = vmatprep.subr.mxu0 0.0
    %694 = vmatpush1.msra.mxu0 0.0
    %695 = vmatprep.subr.mxu0 0.0
    %696 = vmatpush1.msra.mxu0 0.0
    %697 = vmatprep.subr.mxu0 0.0
    %698 = vmatpush1.msra.mxu0 0.0
    %699 = vmatprep.subr.mxu0 0.0
    %700 = vmatpush1.msra.mxu0 0.0
    %701 = vmatprep.mubr.f32.mxu0 0.0
    %702 = vmatmul.mubr.f32.gmra.mrb[0].mxu0 %v565
    %v703 = vpop.f32.mrb[0].mxu0
    %v704 = vadd.f32 0.0, %v703
    %v705 = vpop.f32.mrb[0].mxu0
    %v706 = vadd.f32 0.0, %v705
    %707 = vdwg.mxu0
    %v708 = vadd.f32 %v704, %v316
    %v709 = vadd.f32 %v706, %v320
    %v710 = vxor.u32 %v708, 2147483648
    %v711 = vxor.u32 %v709, 2147483648
    %v712 = vmul.f32 %v710, 1.442695
    %v713 = vpow.pop %v712
    %v714 = vmul.f32 %v711, 1.442695
    %v715 = vpow.pop %v714
    %v716 = vadd.f32 %v713, 1.0
    %v717 = vadd.f32 %v715, 1.0
    %v718 = vrcp.pop %v716
    %v719 = vmul.f32 1.0, %v718
    %v720 = vrcp.pop %v717
    %v721 = vmul.f32 1.0, %v720
    %v722 = vtanh.pop %v709
    %v723 = vmul.f32 %v719, %v522
    %725 = vrot.lane.b32.xlu0 %v722, 64
    %v726 = vpop.permute.xlu0 %725
    %v728 = vmul.f32 %v719, %v726
    %730 = vrot.lane.b32.xlu0 %v728, 64
    %v731 = vpop.permute.xlu0 %730
    %v733 = vadd.f32 %v723, %v731
    %v734 = vtanh.pop %v733
    %736 = vrot.lane.b32.xlu0 %v734, 64
    %v737 = vpop.permute.xlu0 %736
    %v739 = vmul.f32 %v721, %v737
    %v740 = vadd.f32 %v213, %v633
    %v741 = vadd.f32 %v215, %v635
    %v742 = vxor.u32 %v740, 2147483648
    %v743 = vxor.u32 %v741, 2147483648
    %v744 = vmul.f32 %v742, 1.442695
    %v745 = vpow.pop %v744
    %v746 = vmul.f32 %v743, 1.442695
    %v747 = vpow.pop %v746
    %v748 = vadd.f32 %v745, 1.0
    %v749 = vadd.f32 %v747, 1.0
    %v750 = vrcp.pop %v748
    %v751 = vmul.f32 1.0, %v750
    %v752 = vrcp.pop %v749
    %v753 = vmul.f32 1.0, %v752
    %v754 = vtanh.pop %v741
    %v755 = vmul.f32 %v751, %v554
    %757 = vrot.lane.b32.xlu0 %v754, 64
    %v758 = vpop.permute.xlu0 %757
    %v760 = vmul.f32 %v751, %v758
    %762 = vrot.lane.b32.xlu0 %v760, 64
    %v763 = vpop.permute.xlu0 %762
    %v765 = vadd.f32 %v755, %v763
    %v766 = vtanh.pop %v765
    %768 = vrot.lane.b32.xlu0 %v766, 64
    %v769 = vpop.permute.xlu0 %768
    %v771 = vmul.f32 %v753, %v769
    %773 = vrot.lane.b32.xlu0 %v739, 64
    %v774 = vpop.permute.xlu0 %773
    %v776 = vsel %vm353, %v771, %v774
    %777 = vmatprep.subr.mxu0 %v248
    %778 = vmatpush1.msra.mxu0 %v247
    %779 = vmatprep.subr.mxu0 %v252
    %780 = vmatpush1.msra.mxu0 %v251
    %781 = vmatprep.subr.mxu0 %v256
    %782 = vmatpush1.msra.mxu0 %v255
    %783 = vmatprep.subr.mxu0 %v260
    %784 = vmatpush1.msra.mxu0 %v259
    %785 = vmatprep.subr.mxu0 %v264
    %786 = vmatpush1.msra.mxu0 %v263
    %787 = vmatprep.subr.mxu0 %v268
    %788 = vmatpush1.msra.mxu0 %v267
    %789 = vmatprep.subr.mxu0 %v272
    %790 = vmatpush1.msra.mxu0 %v271
    %791 = vmatprep.subr.mxu0 %v276
    %792 = vmatpush1.msra.mxu0 %v275
    %793 = vmatprep.subr.mxu0 %v280
    %794 = vmatpush1.msra.mxu0 %v279
    %795 = vmatprep.subr.mxu0 %v284
    %796 = vmatpush1.msra.mxu0 %v283
    %797 = vmatprep.subr.mxu0 %v288
    %798 = vmatpush1.msra.mxu0 %v287
    %799 = vmatprep.subr.mxu0 %v292
    %800 = vmatpush1.msra.mxu0 %v291
    %801 = vmatprep.subr.mxu0 %v296
    %802 = vmatpush1.msra.mxu0 %v295
    %803 = vmatprep.subr.mxu0 %v300
    %804 = vmatpush1.msra.mxu0 %v299
    %805 = vmatprep.subr.mxu0 %v304
    %806 = vmatpush1.msra.mxu0 %v303
    %807 = vmatprep.subr.mxu0 %v308
    %808 = vmatpush1.msra.mxu0 %v307
    %809 = vmatprep.subr.mxu0 0.0
    %810 = vmatpush1.msra.mxu0 0.0
    %811 = vmatprep.subr.mxu0 0.0
    %812 = vmatpush1.msra.mxu0 0.0
    %813 = vmatprep.subr.mxu0 0.0
    %814 = vmatpush1.msra.mxu0 0.0
    %815 = vmatprep.subr.mxu0 0.0
    %816 = vmatpush1.msra.mxu0 0.0
    %817 = vmatprep.subr.mxu0 0.0
    %818 = vmatpush1.msra.mxu0 0.0
    %819 = vmatprep.subr.mxu0 0.0
    %820 = vmatpush1.msra.mxu0 0.0
    %821 = vmatprep.subr.mxu0 0.0
    %822 = vmatpush1.msra.mxu0 0.0
    %823 = vmatprep.subr.mxu0 0.0
    %824 = vmatpush1.msra.mxu0 0.0
    %825 = vmatprep.subr.mxu0 0.0
    %826 = vmatpush1.msra.mxu0 0.0
    %827 = vmatprep.subr.mxu0 0.0
    %828 = vmatpush1.msra.mxu0 0.0
    %829 = vmatprep.subr.mxu0 0.0
    %830 = vmatpush1.msra.mxu0 0.0
    %831 = vmatprep.subr.mxu0 0.0
    %832 = vmatpush1.msra.mxu0 0.0
    %833 = vmatprep.subr.mxu0 0.0
    %834 = vmatpush1.msra.mxu0 0.0
    %835 = vmatprep.subr.mxu0 0.0
    %836 = vmatpush1.msra.mxu0 0.0
    %837 = vmatprep.subr.mxu0 0.0
    %838 = vmatpush1.msra.mxu0 0.0
    %839 = vmatprep.subr.mxu0 0.0
    %840 = vmatpush1.msra.mxu0 0.0
    %841 = vmatprep.mubr.f32.mxu0 0.0
    %842 = vmatmul.mubr.f32.gmra.mrb[0].mxu0 %v776
    %v843 = vpop.f32.mrb[0].mxu0
    %v844 = vadd.f32 0.0, %v843
    %v845 = vpop.f32.mrb[0].mxu0
    %v846 = vadd.f32 0.0, %v845
    %847 = vdwg.mxu0
    %848 = vmatprep.subr.mxu0 %v250
    %849 = vmatpush1.msra.mxu0 %v249
    %850 = vmatprep.subr.mxu0 %v254
    %851 = vmatpush1.msra.mxu0 %v253
    %852 = vmatprep.subr.mxu0 %v258
    %853 = vmatpush1.msra.mxu0 %v257
    %854 = vmatprep.subr.mxu0 %v262
    %855 = vmatpush1.msra.mxu0 %v261
    %856 = vmatprep.subr.mxu0 %v266
    %857 = vmatpush1.msra.mxu0 %v265
    %858 = vmatprep.subr.mxu0 %v270
    %859 = vmatpush1.msra.mxu0 %v269
    %860 = vmatprep.subr.mxu0 %v274
    %861 = vmatpush1.msra.mxu0 %v273
    %862 = vmatprep.subr.mxu0 %v278
    %863 = vmatpush1.msra.mxu0 %v277
    %864 = vmatprep.subr.mxu0 %v282
    %865 = vmatpush1.msra.mxu0 %v281
    %866 = vmatprep.subr.mxu0 %v286
    %867 = vmatpush1.msra.mxu0 %v285
    %868 = vmatprep.subr.mxu0 %v290
    %869 = vmatpush1.msra.mxu0 %v289
    %870 = vmatprep.subr.mxu0 %v294
    %871 = vmatpush1.msra.mxu0 %v293
    %872 = vmatprep.subr.mxu0 %v298
    %873 = vmatpush1.msra.mxu0 %v297
    %874 = vmatprep.subr.mxu0 %v302
    %875 = vmatpush1.msra.mxu0 %v301
    %876 = vmatprep.subr.mxu0 %v306
    %877 = vmatpush1.msra.mxu0 %v305
    %878 = vmatprep.subr.mxu0 %v310
    %879 = vmatpush1.msra.mxu0 %v309
    %880 = vmatprep.subr.mxu0 0.0
    %881 = vmatpush1.msra.mxu0 0.0
    %882 = vmatprep.subr.mxu0 0.0
    %883 = vmatpush1.msra.mxu0 0.0
    %884 = vmatprep.subr.mxu0 0.0
    %885 = vmatpush1.msra.mxu0 0.0
    %886 = vmatprep.subr.mxu0 0.0
    %887 = vmatpush1.msra.mxu0 0.0
    %888 = vmatprep.subr.mxu0 0.0
    %889 = vmatpush1.msra.mxu0 0.0
    %890 = vmatprep.subr.mxu0 0.0
    %891 = vmatpush1.msra.mxu0 0.0
    %892 = vmatprep.subr.mxu0 0.0
    %893 = vmatpush1.msra.mxu0 0.0
    %894 = vmatprep.subr.mxu0 0.0
    %895 = vmatpush1.msra.mxu0 0.0
    %896 = vmatprep.subr.mxu0 0.0
    %897 = vmatpush1.msra.mxu0 0.0
    %898 = vmatprep.subr.mxu0 0.0
    %899 = vmatpush1.msra.mxu0 0.0
    %900 = vmatprep.subr.mxu0 0.0
    %901 = vmatpush1.msra.mxu0 0.0
    %902 = vmatprep.subr.mxu0 0.0
    %903 = vmatpush1.msra.mxu0 0.0
    %904 = vmatprep.subr.mxu0 0.0
    %905 = vmatpush1.msra.mxu0 0.0
    %906 = vmatprep.subr.mxu0 0.0
    %907 = vmatpush1.msra.mxu0 0.0
    %908 = vmatprep.subr.mxu0 0.0
    %909 = vmatpush1.msra.mxu0 0.0
    %910 = vmatprep.subr.mxu0 0.0
    %911 = vmatpush1.msra.mxu0 0.0
    %912 = vmatprep.mubr.f32.mxu0 0.0
    %913 = vmatmul.mubr.f32.gmra.mrb[0].mxu0 %v776
    %v914 = vpop.f32.mrb[0].mxu0
    %v915 = vadd.f32 0.0, %v914
    %v916 = vpop.f32.mrb[0].mxu0
    %v917 = vadd.f32 0.0, %v916
    %918 = vdwg.mxu0
    %v919 = vadd.f32 %v915, %v316
    %v920 = vadd.f32 %v917, %v320
    %v921 = vxor.u32 %v919, 2147483648
    %v922 = vxor.u32 %v920, 2147483648
    %v923 = vmul.f32 %v921, 1.442695
    %v924 = vpow.pop %v923
    %v925 = vmul.f32 %v922, 1.442695
    %v926 = vpow.pop %v925
    %v927 = vadd.f32 %v924, 1.0
    %v928 = vadd.f32 %v926, 1.0
    %v929 = vrcp.pop %v927
    %v930 = vmul.f32 1.0, %v929
    %v931 = vrcp.pop %v928
    %v932 = vmul.f32 1.0, %v931
    %v933 = vtanh.pop %v920
    %v934 = vmul.f32 %v930, %v733
    %936 = vrot.lane.b32.xlu0 %v933, 64
    %v937 = vpop.permute.xlu0 %936
    %v939 = vmul.f32 %v930, %v937
    %941 = vrot.lane.b32.xlu0 %v939, 64
    %v942 = vpop.permute.xlu0 %941
    %v944 = vadd.f32 %v934, %v942
    %v945 = vtanh.pop %v944
    %947 = vrot.lane.b32.xlu0 %v945, 64
    %v948 = vpop.permute.xlu0 %947
    %v950 = vmul.f32 %v932, %v948
    %v951 = vadd.f32 %v219, %v844
    %v952 = vadd.f32 %v221, %v846
    %v953 = vxor.u32 %v951, 2147483648
    %v954 = vxor.u32 %v952, 2147483648
    %v955 = vmul.f32 %v953, 1.442695
    %v956 = vpow.pop %v955
    %v957 = vmul.f32 %v954, 1.442695
    %v958 = vpow.pop %v957
    %v959 = vadd.f32 %v956, 1.0
    %v960 = vadd.f32 %v958, 1.0
    %v961 = vrcp.pop %v959
    %v962 = vmul.f32 1.0, %v961
    %v963 = vrcp.pop %v960
    %v964 = vmul.f32 1.0, %v963
    %v965 = vtanh.pop %v952
    %v966 = vmul.f32 %v962, %v765
    %968 = vrot.lane.b32.xlu0 %v965, 64
    %v969 = vpop.permute.xlu0 %968
    %v971 = vmul.f32 %v962, %v969
    %973 = vrot.lane.b32.xlu0 %v971, 64
    %v974 = vpop.permute.xlu0 %973
    %v976 = vadd.f32 %v966, %v974
    %v977 = vtanh.pop %v976
    %979 = vrot.lane.b32.xlu0 %v977, 64
    %v980 = vpop.permute.xlu0 %979
    %v982 = vmul.f32 %v964, %v980
    %984 = vrot.lane.b32.xlu0 %v950, 64
    %v985 = vpop.permute.xlu0 %984
    %v987 = vsel %vm353, %v982, %v985
    %988 = vmatprep.subr.mxu0 %v248
    %989 = vmatpush1.msra.mxu0 %v247
    %990 = vmatprep.subr.mxu0 %v252
    %991 = vmatpush1.msra.mxu0 %v251
    %992 = vmatprep.subr.mxu0 %v256
    %993 = vmatpush1.msra.mxu0 %v255
    %994 = vmatprep.subr.mxu0 %v260
    %995 = vmatpush1.msra.mxu0 %v259
    %996 = vmatprep.subr.mxu0 %v264
    %997 = vmatpush1.msra.mxu0 %v263
    %998 = vmatprep.subr.mxu0 %v268
    %999 = vmatpush1.msra.mxu0 %v267
    %1000 = vmatprep.subr.mxu0 %v272
    %1001 = vmatpush1.msra.mxu0 %v271
    %1002 = vmatprep.subr.mxu0 %v276
    %1003 = vmatpush1.msra.mxu0 %v275
    %1004 = vmatprep.subr.mxu0 %v280
    %1005 = vmatpush1.msra.mxu0 %v279
    %1006 = vmatprep.subr.mxu0 %v284
    %1007 = vmatpush1.msra.mxu0 %v283
    %1008 = vmatprep.subr.mxu0 %v288
    %1009 = vmatpush1.msra.mxu0 %v287
    %1010 = vmatprep.subr.mxu0 %v292
    %1011 = vmatpush1.msra.mxu0 %v291
    %1012 = vmatprep.subr.mxu0 %v296
    %1013 = vmatpush1.msra.mxu0 %v295
    %1014 = vmatprep.subr.mxu0 %v300
    %1015 = vmatpush1.msra.mxu0 %v299
    %1016 = vmatprep.subr.mxu0 %v304
    %1017 = vmatpush1.msra.mxu0 %v303
    %1018 = vmatprep.subr.mxu0 %v308
    %1019 = vmatpush1.msra.mxu0 %v307
    %1020 = vmatprep.subr.mxu0 0.0
    %1021 = vmatpush1.msra.mxu0 0.0
    %1022 = vmatprep.subr.mxu0 0.0
    %1023 = vmatpush1.msra.mxu0 0.0
    %1024 = vmatprep.subr.mxu0 0.0
    %1025 = vmatpush1.msra.mxu0 0.0
    %1026 = vmatprep.subr.mxu0 0.0
    %1027 = vmatpush1.msra.mxu0 0.0
    %1028 = vmatprep.subr.mxu0 0.0
    %1029 = vmatpush1.msra.mxu0 0.0
    %1030 = vmatprep.subr.mxu0 0.0
    %1031 = vmatpush1.msra.mxu0 0.0
    %1032 = vmatprep.subr.mxu0 0.0
    %1033 = vmatpush1.msra.mxu0 0.0
    %1034 = vmatprep.subr.mxu0 0.0
    %1035 = vmatpush1.msra.mxu0 0.0
    %1036 = vmatprep.subr.mxu0 0.0
    %1037 = vmatpush1.msra.mxu0 0.0
    %1038 = vmatprep.subr.mxu0 0.0
    %1039 = vmatpush1.msra.mxu0 0.0
    %1040 = vmatprep.subr.mxu0 0.0
    %1041 = vmatpush1.msra.mxu0 0.0
    %1042 = vmatprep.subr.mxu0 0.0
    %1043 = vmatpush1.msra.mxu0 0.0
    %1044 = vmatprep.subr.mxu0 0.0
    %1045 = vmatpush1.msra.mxu0 0.0
    %1046 = vmatprep.subr.mxu0 0.0
    %1047 = vmatpush1.msra.mxu0 0.0
    %1048 = vmatprep.subr.mxu0 0.0
    %1049 = vmatpush1.msra.mxu0 0.0
    %1050 = vmatprep.subr.mxu0 0.0
    %1051 = vmatpush1.msra.mxu0 0.0
    %1052 = vmatprep.mubr.f32.mxu0 0.0
    %1053 = vmatmul.mubr.f32.gmra.mrb[0].mxu0 %v987
    %v1054 = vpop.f32.mrb[0].mxu0
    %v1055 = vadd.f32 0.0, %v1054
    %v1056 = vpop.f32.mrb[0].mxu0
    %v1057 = vadd.f32 0.0, %v1056
    %1058 = vdwg.mxu0
    %1059 = vmatprep.subr.mxu0 %v250
    %1060 = vmatpush1.msra.mxu0 %v249
    %1061 = vmatprep.subr.mxu0 %v254
    %1062 = vmatpush1.msra.mxu0 %v253
    %1063 = vmatprep.subr.mxu0 %v258
    %1064 = vmatpush1.msra.mxu0 %v257
    %1065 = vmatprep.subr.mxu0 %v262
    %1066 = vmatpush1.msra.mxu0 %v261
    %1067 = vmatprep.subr.mxu0 %v266
    %1068 = vmatpush1.msra.mxu0 %v265
    %1069 = vmatprep.subr.mxu0 %v270
    %1070 = vmatpush1.msra.mxu0 %v269
    %1071 = vmatprep.subr.mxu0 %v274
    %1072 = vmatpush1.msra.mxu0 %v273
    %1073 = vmatprep.subr.mxu0 %v278
    %1074 = vmatpush1.msra.mxu0 %v277
    %1075 = vmatprep.subr.mxu0 %v282
    %1076 = vmatpush1.msra.mxu0 %v281
    %1077 = vmatprep.subr.mxu0 %v286
    %1078 = vmatpush1.msra.mxu0 %v285
    %1079 = vmatprep.subr.mxu0 %v290
    %1080 = vmatpush1.msra.mxu0 %v289
    %1081 = vmatprep.subr.mxu0 %v294
    %1082 = vmatpush1.msra.mxu0 %v293
    %1083 = vmatprep.subr.mxu0 %v298
    %1084 = vmatpush1.msra.mxu0 %v297
    %1085 = vmatprep.subr.mxu0 %v302
    %1086 = vmatpush1.msra.mxu0 %v301
    %1087 = vmatprep.subr.mxu0 %v306
    %1088 = vmatpush1.msra.mxu0 %v305
    %1089 = vmatprep.subr.mxu0 %v310
    %1090 = vmatpush1.msra.mxu0 %v309
    %1091 = vmatprep.subr.mxu0 0.0
    %1092 = vmatpush1.msra.mxu0 0.0
    %1093 = vmatprep.subr.mxu0 0.0
    %1094 = vmatpush1.msra.mxu0 0.0
    %1095 = vmatprep.subr.mxu0 0.0
    %1096 = vmatpush1.msra.mxu0 0.0
    %1097 = vmatprep.subr.mxu0 0.0
    %1098 = vmatpush1.msra.mxu0 0.0
    %1099 = vmatprep.subr.mxu0 0.0
    %1100 = vmatpush1.msra.mxu0 0.0
    %1101 = vmatprep.subr.mxu0 0.0
    %1102 = vmatpush1.msra.mxu0 0.0
    %1103 = vmatprep.subr.mxu0 0.0
    %1104 = vmatpush1.msra.mxu0 0.0
    %1105 = vmatprep.subr.mxu0 0.0
    %1106 = vmatpush1.msra.mxu0 0.0
    %1107 = vmatprep.subr.mxu0 0.0
    %1108 = vmatpush1.msra.mxu0 0.0
    %1109 = vmatprep.subr.mxu0 0.0
    %1110 = vmatpush1.msra.mxu0 0.0
    %1111 = vmatprep.subr.mxu0 0.0
    %1112 = vmatpush1.msra.mxu0 0.0
    %1113 = vmatprep.subr.mxu0 0.0
    %1114 = vmatpush1.msra.mxu0 0.0
    %1115 = vmatprep.subr.mxu0 0.0
    %1116 = vmatpush1.msra.mxu0 0.0
    %1117 = vmatprep.subr.mxu0 0.0
    %1118 = vmatpush1.msra.mxu0 0.0
    %1119 = vmatprep.subr.mxu0 0.0
    %1120 = vmatpush1.msra.mxu0 0.0
    %1121 = vmatprep.subr.mxu0 0.0
    %1122 = vmatpush1.msra.mxu0 0.0
    %1123 = vmatprep.mubr.f32.mxu0 0.0
    %1124 = vmatmul.mubr.f32.gmra.mrb[0].mxu0 %v987
    %v1125 = vpop.f32.mrb[0].mxu0
    %v1126 = vadd.f32 0.0, %v1125
    %v1127 = vpop.f32.mrb[0].mxu0
    %v1128 = vadd.f32 0.0, %v1127
    %1129 = vdwg.mxu0
    %v1130 = vadd.f32 %v1126, %v316
    %v1131 = vadd.f32 %v1128, %v320
    %v1132 = vxor.u32 %v1130, 2147483648
    %v1133 = vxor.u32 %v1131, 2147483648
    %v1134 = vmul.f32 %v1132, 1.442695
    %v1135 = vpow.pop %v1134
    %v1136 = vmul.f32 %v1133, 1.442695
    %v1137 = vpow.pop %v1136
    %v1138 = vadd.f32 %v1135, 1.0
    %v1139 = vadd.f32 %v1137, 1.0
    %v1140 = vrcp.pop %v1138
    %v1141 = vmul.f32 1.0, %v1140
    %v1142 = vrcp.pop %v1139
    %v1143 = vmul.f32 1.0, %v1142
    %v1144 = vtanh.pop %v1131
    %v1145 = vmul.f32 %v1141, %v944
    %1147 = vrot.lane.b32.xlu0 %v1144, 64
    %v1148 = vpop.permute.xlu0 %1147
    %v1150 = vmul.f32 %v1141, %v1148
    %1152 = vrot.lane.b32.xlu0 %v1150, 64
    %v1153 = vpop.permute.xlu0 %1152
    %v1155 = vadd.f32 %v1145, %v1153
    %v1156 = vtanh.pop %v1155
    %1158 = vrot.lane.b32.xlu0 %v1156, 64
    %v1159 = vpop.permute.xlu0 %1158
    %v1161 = vmul.f32 %v1143, %v1159
    %v1162 = vadd.f32 %v225, %v1055
    %v1163 = vadd.f32 %v227, %v1057
    %v1164 = vxor.u32 %v1162, 2147483648
    %v1165 = vxor.u32 %v1163, 2147483648
    %v1166 = vmul.f32 %v1164, 1.442695
    %v1167 = vpow.pop %v1166
    %v1168 = vmul.f32 %v1165, 1.442695
    %v1169 = vpow.pop %v1168
    %v1170 = vadd.f32 %v1167, 1.0
    %v1171 = vadd.f32 %v1169, 1.0
    %v1172 = vrcp.pop %v1170
    %v1173 = vmul.f32 1.0, %v1172
    %v1174 = vrcp.pop %v1171
    %v1175 = vmul.f32 1.0, %v1174
    %v1176 = vtanh.pop %v1163
    %v1177 = vmul.f32 %v1173, %v976
    %1179 = vrot.lane.b32.xlu0 %v1176, 64
    %v1180 = vpop.permute.xlu0 %1179
    %v1182 = vmul.f32 %v1173, %v1180
    %1184 = vrot.lane.b32.xlu0 %v1182, 64
    %v1185 = vpop.permute.xlu0 %1184
    %v1187 = vadd.f32 %v1177, %v1185
    %v1188 = vtanh.pop %v1187
    %1190 = vrot.lane.b32.xlu0 %v1188, 64
    %v1191 = vpop.permute.xlu0 %1190
    %v1193 = vmul.f32 %v1175, %v1191
    %1195 = vrot.lane.b32.xlu0 %v1161, 64
    %v1196 = vpop.permute.xlu0 %1195
    %v1198 = vsel %vm353, %v1193, %v1196
    %1199 = vmatprep.subr.mxu0 %v248
    %1200 = vmatpush1.msra.mxu0 %v247
    %1201 = vmatprep.subr.mxu0 %v252
    %1202 = vmatpush1.msra.mxu0 %v251
    %1203 = vmatprep.subr.mxu0 %v256
    %1204 = vmatpush1.msra.mxu0 %v255
    %1205 = vmatprep.subr.mxu0 %v260
    %1206 = vmatpush1.msra.mxu0 %v259
    %1207 = vmatprep.subr.mxu0 %v264
    %1208 = vmatpush1.msra.mxu0 %v263
    %1209 = vmatprep.subr.mxu0 %v268
    %1210 = vmatpush1.msra.mxu0 %v267
    %1211 = vmatprep.subr.mxu0 %v272
    %1212 = vmatpush1.msra.mxu0 %v271
    %1213 = vmatprep.subr.mxu0 %v276
    %1214 = vmatpush1.msra.mxu0 %v275
    %1215 = vmatprep.subr.mxu0 %v280
    %1216 = vmatpush1.msra.mxu0 %v279
    %1217 = vmatprep.subr.mxu0 %v284
    %1218 = vmatpush1.msra.mxu0 %v283
    %1219 = vmatprep.subr.mxu0 %v288
    %1220 = vmatpush1.msra.mxu0 %v287
    %1221 = vmatprep.subr.mxu0 %v292
    %1222 = vmatpush1.msra.mxu0 %v291
    %1223 = vmatprep.subr.mxu0 %v296
    %1224 = vmatpush1.msra.mxu0 %v295
    %1225 = vmatprep.subr.mxu0 %v300
    %1226 = vmatpush1.msra.mxu0 %v299
    %1227 = vmatprep.subr.mxu0 %v304
    %1228 = vmatpush1.msra.mxu0 %v303
    %1229 = vmatprep.subr.mxu0 %v308
    %1230 = vmatpush1.msra.mxu0 %v307
    %1231 = vmatprep.subr.mxu0 0.0
    %1232 = vmatpush1.msra.mxu0 0.0
    %1233 = vmatprep.subr.mxu0 0.0
    %1234 = vmatpush1.msra.mxu0 0.0
    %1235 = vmatprep.subr.mxu0 0.0
    %1236 = vmatpush1.msra.mxu0 0.0
    %1237 = vmatprep.subr.mxu0 0.0
    %1238 = vmatpush1.msra.mxu0 0.0
    %1239 = vmatprep.subr.mxu0 0.0
    %1240 = vmatpush1.msra.mxu0 0.0
    %1241 = vmatprep.subr.mxu0 0.0
    %1242 = vmatpush1.msra.mxu0 0.0
    %1243 = vmatprep.subr.mxu0 0.0
    %1244 = vmatpush1.msra.mxu0 0.0
    %1245 = vmatprep.subr.mxu0 0.0
    %1246 = vmatpush1.msra.mxu0 0.0
    %1247 = vmatprep.subr.mxu0 0.0
    %1248 = vmatpush1.msra.mxu0 0.0
    %1249 = vmatprep.subr.mxu0 0.0
    %1250 = vmatpush1.msra.mxu0 0.0
    %1251 = vmatprep.subr.mxu0 0.0
    %1252 = vmatpush1.msra.mxu0 0.0
    %1253 = vmatprep.subr.mxu0 0.0
    %1254 = vmatpush1.msra.mxu0 0.0
    %1255 = vmatprep.subr.mxu0 0.0
    %1256 = vmatpush1.msra.mxu0 0.0
    %1257 = vmatprep.subr.mxu0 0.0
    %1258 = vmatpush1.msra.mxu0 0.0
    %1259 = vmatprep.subr.mxu0 0.0
    %1260 = vmatpush1.msra.mxu0 0.0
    %1261 = vmatprep.subr.mxu0 0.0
    %1262 = vmatpush1.msra.mxu0 0.0
    %1263 = vmatprep.mubr.f32.mxu0 0.0
    %1264 = vmatmul.mubr.f32.gmra.mrb[0].mxu0 %v1198
    %v1265 = vpop.f32.mrb[0].mxu0
    %v1266 = vadd.f32 0.0, %v1265
    %v1267 = vpop.f32.mrb[0].mxu0
    %v1268 = vadd.f32 0.0, %v1267
    %1269 = vdwg.mxu0
    %1270 = vmatprep.subr.mxu0 %v250
    %1271 = vmatpush1.msra.mxu0 %v249
    %1272 = vmatprep.subr.mxu0 %v254
    %1273 = vmatpush1.msra.mxu0 %v253
    %1274 = vmatprep.subr.mxu0 %v258
    %1275 = vmatpush1.msra.mxu0 %v257
    %1276 = vmatprep.subr.mxu0 %v262
    %1277 = vmatpush1.msra.mxu0 %v261
    %1278 = vmatprep.subr.mxu0 %v266
    %1279 = vmatpush1.msra.mxu0 %v265
    %1280 = vmatprep.subr.mxu0 %v270
    %1281 = vmatpush1.msra.mxu0 %v269
    %1282 = vmatprep.subr.mxu0 %v274
    %1283 = vmatpush1.msra.mxu0 %v273
    %1284 = vmatprep.subr.mxu0 %v278
    %1285 = vmatpush1.msra.mxu0 %v277
    %1286 = vmatprep.subr.mxu0 %v282
    %1287 = vmatpush1.msra.mxu0 %v281
    %1288 = vmatprep.subr.mxu0 %v286
    %1289 = vmatpush1.msra.mxu0 %v285
    %1290 = vmatprep.subr.mxu0 %v290
    %1291 = vmatpush1.msra.mxu0 %v289
    %1292 = vmatprep.subr.mxu0 %v294
    %1293 = vmatpush1.msra.mxu0 %v293
    %1294 = vmatprep.subr.mxu0 %v298
    %1295 = vmatpush1.msra.mxu0 %v297
    %1296 = vmatprep.subr.mxu0 %v302
    %1297 = vmatpush1.msra.mxu0 %v301
    %1298 = vmatprep.subr.mxu0 %v306
    %1299 = vmatpush1.msra.mxu0 %v305
    %1300 = vmatprep.subr.mxu0 %v310
    %1301 = vmatpush1.msra.mxu0 %v309
    %1302 = vmatprep.subr.mxu0 0.0
    %1303 = vmatpush1.msra.mxu0 0.0
    %1304 = vmatprep.subr.mxu0 0.0
    %1305 = vmatpush1.msra.mxu0 0.0
    %1306 = vmatprep.subr.mxu0 0.0
    %1307 = vmatpush1.msra.mxu0 0.0
    %1308 = vmatprep.subr.mxu0 0.0
    %1309 = vmatpush1.msra.mxu0 0.0
    %1310 = vmatprep.subr.mxu0 0.0
    %1311 = vmatpush1.msra.mxu0 0.0
    %1312 = vmatprep.subr.mxu0 0.0
    %1313 = vmatpush1.msra.mxu0 0.0
    %1314 = vmatprep.subr.mxu0 0.0
    %1315 = vmatpush1.msra.mxu0 0.0
    %1316 = vmatprep.subr.mxu0 0.0
    %1317 = vmatpush1.msra.mxu0 0.0
    %1318 = vmatprep.subr.mxu0 0.0
    %1319 = vmatpush1.msra.mxu0 0.0
    %1320 = vmatprep.subr.mxu0 0.0
    %1321 = vmatpush1.msra.mxu0 0.0
    %1322 = vmatprep.subr.mxu0 0.0
    %1323 = vmatpush1.msra.mxu0 0.0
    %1324 = vmatprep.subr.mxu0 0.0
    %1325 = vmatpush1.msra.mxu0 0.0
    %1326 = vmatprep.subr.mxu0 0.0
    %1327 = vmatpush1.msra.mxu0 0.0
    %1328 = vmatprep.subr.mxu0 0.0
    %1329 = vmatpush1.msra.mxu0 0.0
    %1330 = vmatprep.subr.mxu0 0.0
    %1331 = vmatpush1.msra.mxu0 0.0
    %1332 = vmatprep.subr.mxu0 0.0
    %1333 = vmatpush1.msra.mxu0 0.0
    %1334 = vmatprep.mubr.f32.mxu0 0.0
    %1335 = vmatmul.mubr.f32.gmra.mrb[0].mxu0 %v1198
    %v1336 = vpop.f32.mrb[0].mxu0
    %v1337 = vadd.f32 0.0, %v1336
    %v1338 = vpop.f32.mrb[0].mxu0
    %v1339 = vadd.f32 0.0, %v1338
    %1340 = vdwg.mxu0
    %v1341 = vadd.f32 %v1337, %v316
    %v1342 = vadd.f32 %v1339, %v320
    %v1343 = vxor.u32 %v1341, 2147483648
    %v1344 = vxor.u32 %v1342, 2147483648
    %v1345 = vmul.f32 %v1343, 1.442695
    %v1346 = vpow.pop %v1345
    %v1347 = vmul.f32 %v1344, 1.442695
    %v1348 = vpow.pop %v1347
    %v1349 = vadd.f32 %v1346, 1.0
    %v1350 = vadd.f32 %v1348, 1.0
    %v1351 = vrcp.pop %v1349
    %v1352 = vmul.f32 1.0, %v1351
    %v1353 = vrcp.pop %v1350
    %v1354 = vmul.f32 1.0, %v1353
    %v1355 = vtanh.pop %v1342
    %v1356 = vmul.f32 %v1352, %v1155
    %1358 = vrot.lane.b32.xlu0 %v1355, 64
    %v1359 = vpop.permute.xlu0 %1358
    %v1361 = vmul.f32 %v1352, %v1359
    %1363 = vrot.lane.b32.xlu0 %v1361, 64
    %v1364 = vpop.permute.xlu0 %1363
    %v1366 = vadd.f32 %v1356, %v1364
    %v1367 = vtanh.pop %v1366
    %1369 = vrot.lane.b32.xlu0 %v1367, 64
    %v1370 = vpop.permute.xlu0 %1369
    %v1372 = vmul.f32 %v1354, %v1370
    %v1373 = vadd.f32 %v231, %v1266
    %v1374 = vadd.f32 %v233, %v1268
    %v1375 = vxor.u32 %v1373, 2147483648
    %v1376 = vxor.u32 %v1374, 2147483648
    %v1377 = vmul.f32 %v1375, 1.442695
    %v1378 = vpow.pop %v1377
    %v1379 = vmul.f32 %v1376, 1.442695
    %v1380 = vpow.pop %v1379
    %v1381 = vadd.f32 %v1378, 1.0
    %v1382 = vadd.f32 %v1380, 1.0
    %v1383 = vrcp.pop %v1381
    %v1384 = vmul.f32 1.0, %v1383
    %v1385 = vrcp.pop %v1382
    %v1386 = vmul.f32 1.0, %v1385
    %v1387 = vtanh.pop %v1374
    %v1388 = vmul.f32 %v1384, %v1187
    %1390 = vrot.lane.b32.xlu0 %v1387, 64
    %v1391 = vpop.permute.xlu0 %1390
    %v1393 = vmul.f32 %v1384, %v1391
    %1395 = vrot.lane.b32.xlu0 %v1393, 64
    %v1396 = vpop.permute.xlu0 %1395
    %v1398 = vadd.f32 %v1388, %v1396
    %v1399 = vtanh.pop %v1398
    %1401 = vrot.lane.b32.xlu0 %v1399, 64
    %v1402 = vpop.permute.xlu0 %1401
    %v1404 = vmul.f32 %v1386, %v1402
    %1406 = vrot.lane.b32.xlu0 %v1372, 64
    %v1407 = vpop.permute.xlu0 %1406
    %v1409 = vsel %vm353, %v1404, %v1407
    %1410 = vmatprep.subr.mxu0 %v248
    %1411 = vmatpush1.msra.mxu0 %v247
    %1412 = vmatprep.subr.mxu0 %v252
    %1413 = vmatpush1.msra.mxu0 %v251
    %1414 = vmatprep.subr.mxu0 %v256
    %1415 = vmatpush1.msra.mxu0 %v255
    %1416 = vmatprep.subr.mxu0 %v260
    %1417 = vmatpush1.msra.mxu0 %v259
    %1418 = vmatprep.subr.mxu0 %v264
    %1419 = vmatpush1.msra.mxu0 %v263
    %1420 = vmatprep.subr.mxu0 %v268
    %1421 = vmatpush1.msra.mxu0 %v267
    %1422 = vmatprep.subr.mxu0 %v272
    %1423 = vmatpush1.msra.mxu0 %v271
    %1424 = vmatprep.subr.mxu0 %v276
    %1425 = vmatpush1.msra.mxu0 %v275
    %1426 = vmatprep.subr.mxu0 %v280
    %1427 = vmatpush1.msra.mxu0 %v279
    %1428 = vmatprep.subr.mxu0 %v284
    %1429 = vmatpush1.msra.mxu0 %v283
    %1430 = vmatprep.subr.mxu0 %v288
    %1431 = vmatpush1.msra.mxu0 %v287
    %1432 = vmatprep.subr.mxu0 %v292
    %1433 = vmatpush1.msra.mxu0 %v291
    %1434 = vmatprep.subr.mxu0 %v296
    %1435 = vmatpush1.msra.mxu0 %v295
    %1436 = vmatprep.subr.mxu0 %v300
    %1437 = vmatpush1.msra.mxu0 %v299
    %1438 = vmatprep.subr.mxu0 %v304
    %1439 = vmatpush1.msra.mxu0 %v303
    %1440 = vmatprep.subr.mxu0 %v308
    %1441 = vmatpush1.msra.mxu0 %v307
    %1442 = vmatprep.subr.mxu0 0.0
    %1443 = vmatpush1.msra.mxu0 0.0
    %1444 = vmatprep.subr.mxu0 0.0
    %1445 = vmatpush1.msra.mxu0 0.0
    %1446 = vmatprep.subr.mxu0 0.0
    %1447 = vmatpush1.msra.mxu0 0.0
    %1448 = vmatprep.subr.mxu0 0.0
    %1449 = vmatpush1.msra.mxu0 0.0
    %1450 = vmatprep.subr.mxu0 0.0
    %1451 = vmatpush1.msra.mxu0 0.0
    %1452 = vmatprep.subr.mxu0 0.0
    %1453 = vmatpush1.msra.mxu0 0.0
    %1454 = vmatprep.subr.mxu0 0.0
    %1455 = vmatpush1.msra.mxu0 0.0
    %1456 = vmatprep.subr.mxu0 0.0
    %1457 = vmatpush1.msra.mxu0 0.0
    %1458 = vmatprep.subr.mxu0 0.0
    %1459 = vmatpush1.msra.mxu0 0.0
    %1460 = vmatprep.subr.mxu0 0.0
    %1461 = vmatpush1.msra.mxu0 0.0
    %1462 = vmatprep.subr.mxu0 0.0
    %1463 = vmatpush1.msra.mxu0 0.0
    %1464 = vmatprep.subr.mxu0 0.0
    %1465 = vmatpush1.msra.mxu0 0.0
    %1466 = vmatprep.subr.mxu0 0.0
    %1467 = vmatpush1.msra.mxu0 0.0
    %1468 = vmatprep.subr.mxu0 0.0
    %1469 = vmatpush1.msra.mxu0 0.0
    %1470 = vmatprep.subr.mxu0 0.0
    %1471 = vmatpush1.msra.mxu0 0.0
    %1472 = vmatprep.subr.mxu0 0.0
    %1473 = vmatpush1.msra.mxu0 0.0
    %1474 = vmatprep.mubr.f32.mxu0 0.0
    %1475 = vmatmul.mubr.f32.gmra.mrb[0].mxu0 %v1409
    %v1476 = vpop.f32.mrb[0].mxu0
    %v1477 = vadd.f32 0.0, %v1476
    %v1478 = vpop.f32.mrb[0].mxu0
    %v1479 = vadd.f32 0.0, %v1478
    %1480 = vdwg.mxu0
    %1481 = vmatprep.subr.mxu0 %v250
    %1482 = vmatpush1.msra.mxu0 %v249
    %1483 = vmatprep.subr.mxu0 %v254
    %1484 = vmatpush1.msra.mxu0 %v253
    %1485 = vmatprep.subr.mxu0 %v258
    %1486 = vmatpush1.msra.mxu0 %v257
    %1487 = vmatprep.subr.mxu0 %v262
    %1488 = vmatpush1.msra.mxu0 %v261
    %1489 = vmatprep.subr.mxu0 %v266
    %1490 = vmatpush1.msra.mxu0 %v265
    %1491 = vmatprep.subr.mxu0 %v270
    %1492 = vmatpush1.msra.mxu0 %v269
    %1493 = vmatprep.subr.mxu0 %v274
    %1494 = vmatpush1.msra.mxu0 %v273
    %1495 = vmatprep.subr.mxu0 %v278
    %1496 = vmatpush1.msra.mxu0 %v277
    %1497 = vmatprep.subr.mxu0 %v282
    %1498 = vmatpush1.msra.mxu0 %v281
    %1499 = vmatprep.subr.mxu0 %v286
    %1500 = vmatpush1.msra.mxu0 %v285
    %1501 = vmatprep.subr.mxu0 %v290
    %1502 = vmatpush1.msra.mxu0 %v289
    %1503 = vmatprep.subr.mxu0 %v294
    %1504 = vmatpush1.msra.mxu0 %v293
    %1505 = vmatprep.subr.mxu0 %v298
    %1506 = vmatpush1.msra.mxu0 %v297
    %1507 = vmatprep.subr.mxu0 %v302
    %1508 = vmatpush1.msra.mxu0 %v301
    %1509 = vmatprep.subr.mxu0 %v306
    %1510 = vmatpush1.msra.mxu0 %v305
    %1511 = vmatprep.subr.mxu0 %v310
    %1512 = vmatpush1.msra.mxu0 %v309
    %1513 = vmatprep.subr.mxu0 0.0
    %1514 = vmatpush1.msra.mxu0 0.0
    %1515 = vmatprep.subr.mxu0 0.0
    %1516 = vmatpush1.msra.mxu0 0.0
    %1517 = vmatprep.subr.mxu0 0.0
    %1518 = vmatpush1.msra.mxu0 0.0
    %1519 = vmatprep.subr.mxu0 0.0
    %1520 = vmatpush1.msra.mxu0 0.0
    %1521 = vmatprep.subr.mxu0 0.0
    %1522 = vmatpush1.msra.mxu0 0.0
    %1523 = vmatprep.subr.mxu0 0.0
    %1524 = vmatpush1.msra.mxu0 0.0
    %1525 = vmatprep.subr.mxu0 0.0
    %1526 = vmatpush1.msra.mxu0 0.0
    %1527 = vmatprep.subr.mxu0 0.0
    %1528 = vmatpush1.msra.mxu0 0.0
    %1529 = vmatprep.subr.mxu0 0.0
    %1530 = vmatpush1.msra.mxu0 0.0
    %1531 = vmatprep.subr.mxu0 0.0
    %1532 = vmatpush1.msra.mxu0 0.0
    %1533 = vmatprep.subr.mxu0 0.0
    %1534 = vmatpush1.msra.mxu0 0.0
    %1535 = vmatprep.subr.mxu0 0.0
    %1536 = vmatpush1.msra.mxu0 0.0
    %1537 = vmatprep.subr.mxu0 0.0
    %1538 = vmatpush1.msra.mxu0 0.0
    %1539 = vmatprep.subr.mxu0 0.0
    %1540 = vmatpush1.msra.mxu0 0.0
    %1541 = vmatprep.subr.mxu0 0.0
    %1542 = vmatpush1.msra.mxu0 0.0
    %1543 = vmatprep.subr.mxu0 0.0
    %1544 = vmatpush1.msra.mxu0 0.0
    %1545 = vmatprep.mubr.f32.mxu0 0.0
    %1546 = vmatmul.mubr.f32.gmra.mrb[0].mxu0 %v1409
    %v1547 = vpop.f32.mrb[0].mxu0
    %v1548 = vadd.f32 0.0, %v1547
    %v1549 = vpop.f32.mrb[0].mxu0
    %v1550 = vadd.f32 0.0, %v1549
    %1551 = vdwg.mxu0
    %v1552 = vadd.f32 %v1548, %v316
    %v1553 = vadd.f32 %v1550, %v320
    %v1554 = vxor.u32 %v1552, 2147483648
    %v1555 = vxor.u32 %v1553, 2147483648
    %v1556 = vmul.f32 %v1554, 1.442695
    %v1557 = vpow.pop %v1556
    %v1558 = vmul.f32 %v1555, 1.442695
    %v1559 = vpow.pop %v1558
    %v1560 = vadd.f32 %v1557, 1.0
    %v1561 = vadd.f32 %v1559, 1.0
    %v1562 = vrcp.pop %v1560
    %v1563 = vmul.f32 1.0, %v1562
    %v1564 = vrcp.pop %v1561
    %v1565 = vmul.f32 1.0, %v1564
    %v1566 = vtanh.pop %v1553
    %v1567 = vmul.f32 %v1563, %v1366
    %1569 = vrot.lane.b32.xlu0 %v1566, 64
    %v1570 = vpop.permute.xlu0 %1569
    %v1572 = vmul.f32 %v1563, %v1570
    %1574 = vrot.lane.b32.xlu0 %v1572, 64
    %v1575 = vpop.permute.xlu0 %1574
    %v1577 = vadd.f32 %v1567, %v1575
    %v1578 = vtanh.pop %v1577
    %1580 = vrot.lane.b32.xlu0 %v1578, 64
    %v1581 = vpop.permute.xlu0 %1580
    %v1583 = vmul.f32 %v1565, %v1581
    %v1584 = vadd.f32 %v237, %v1477
    %v1585 = vadd.f32 %v239, %v1479
    %v1586 = vxor.u32 %v1584, 2147483648
    %v1587 = vxor.u32 %v1585, 2147483648
    %v1588 = vmul.f32 %v1586, 1.442695
    %v1589 = vpow.pop %v1588
    %v1590 = vmul.f32 %v1587, 1.442695
    %v1591 = vpow.pop %v1590
    %v1592 = vadd.f32 %v1589, 1.0
    %v1593 = vadd.f32 %v1591, 1.0
    %v1594 = vrcp.pop %v1592
    %v1595 = vmul.f32 1.0, %v1594
    %v1596 = vrcp.pop %v1593
    %v1597 = vmul.f32 1.0, %v1596
    %v1598 = vtanh.pop %v1585
    %v1599 = vmul.f32 %v1595, %v1398
    %1601 = vrot.lane.b32.xlu0 %v1598, 64
    %v1602 = vpop.permute.xlu0 %1601
    %v1604 = vmul.f32 %v1595, %v1602
    %1606 = vrot.lane.b32.xlu0 %v1604, 64
    %v1607 = vpop.permute.xlu0 %1606
    %v1609 = vadd.f32 %v1599, %v1607
    %v1610 = vtanh.pop %v1609
    %1612 = vrot.lane.b32.xlu0 %v1610, 64
    %v1613 = vpop.permute.xlu0 %1612
    %v1615 = vmul.f32 %v1597, %v1613
    %1617 = vrot.lane.b32.xlu0 %v1583, 64
    %v1618 = vpop.permute.xlu0 %1617
    %v1620 = vsel %vm353, %v1615, %v1618
    %1621 = vmatprep.subr.mxu0 %v248
    %1622 = vmatpush1.msra.mxu0 %v247
    %1623 = vmatprep.subr.mxu0 %v252
    %1624 = vmatpush1.msra.mxu0 %v251
    %1625 = vmatprep.subr.mxu0 %v256
    %1626 = vmatpush1.msra.mxu0 %v255
    %1627 = vmatprep.subr.mxu0 %v260
    %1628 = vmatpush1.msra.mxu0 %v259
    %1629 = vmatprep.subr.mxu0 %v264
    %1630 = vmatpush1.msra.mxu0 %v263
    %1631 = vmatprep.subr.mxu0 %v268
    %1632 = vmatpush1.msra.mxu0 %v267
    %1633 = vmatprep.subr.mxu0 %v272
    %1634 = vmatpush1.msra.mxu0 %v271
    %1635 = vmatprep.subr.mxu0 %v276
    %1636 = vmatpush1.msra.mxu0 %v275
    %1637 = vmatprep.subr.mxu0 %v280
    %1638 = vmatpush1.msra.mxu0 %v279
    %1639 = vmatprep.subr.mxu0 %v284
    %1640 = vmatpush1.msra.mxu0 %v283
    %1641 = vmatprep.subr.mxu0 %v288
    %1642 = vmatpush1.msra.mxu0 %v287
    %1643 = vmatprep.subr.mxu0 %v292
    %1644 = vmatpush1.msra.mxu0 %v291
    %1645 = vmatprep.subr.mxu0 %v296
    %1646 = vmatpush1.msra.mxu0 %v295
    %1647 = vmatprep.subr.mxu0 %v300
    %1648 = vmatpush1.msra.mxu0 %v299
    %1649 = vmatprep.subr.mxu0 %v304
    %1650 = vmatpush1.msra.mxu0 %v303
    %1651 = vmatprep.subr.mxu0 %v308
    %1652 = vmatpush1.msra.mxu0 %v307
    %1653 = vmatprep.subr.mxu0 0.0
    %1654 = vmatpush1.msra.mxu0 0.0
    %1655 = vmatprep.subr.mxu0 0.0
    %1656 = vmatpush1.msra.mxu0 0.0
    %1657 = vmatprep.subr.mxu0 0.0
    %1658 = vmatpush1.msra.mxu0 0.0
    %1659 = vmatprep.subr.mxu0 0.0
    %1660 = vmatpush1.msra.mxu0 0.0
    %1661 = vmatprep.subr.mxu0 0.0
    %1662 = vmatpush1.msra.mxu0 0.0
    %1663 = vmatprep.subr.mxu0 0.0
    %1664 = vmatpush1.msra.mxu0 0.0
    %1665 = vmatprep.subr.mxu0 0.0
    %1666 = vmatpush1.msra.mxu0 0.0
    %1667 = vmatprep.subr.mxu0 0.0
    %1668 = vmatpush1.msra.mxu0 0.0
    %1669 = vmatprep.subr.mxu0 0.0
    %1670 = vmatpush1.msra.mxu0 0.0
    %1671 = vmatprep.subr.mxu0 0.0
    %1672 = vmatpush1.msra.mxu0 0.0
    %1673 = vmatprep.subr.mxu0 0.0
    %1674 = vmatpush1.msra.mxu0 0.0
    %1675 = vmatprep.subr.mxu0 0.0
    %1676 = vmatpush1.msra.mxu0 0.0
    %1677 = vmatprep.subr.mxu0 0.0
    %1678 = vmatpush1.msra.mxu0 0.0
    %1679 = vmatprep.subr.mxu0 0.0
    %1680 = vmatpush1.msra.mxu0 0.0
    %1681 = vmatprep.subr.mxu0 0.0
    %1682 = vmatpush1.msra.mxu0 0.0
    %1683 = vmatprep.subr.mxu0 0.0
    %1684 = vmatpush1.msra.mxu0 0.0
    %1685 = vmatprep.mubr.f32.mxu0 0.0
    %1686 = vmatmul.mubr.f32.gmra.mrb[0].mxu0 %v1620
    %v1687 = vpop.f32.mrb[0].mxu0
    %v1688 = vadd.f32 0.0, %v1687
    %v1689 = vpop.f32.mrb[0].mxu0
    %v1690 = vadd.f32 0.0, %v1689
    %1691 = vdwg.mxu0
    %1692 = vmatprep.subr.mxu0 %v250
    %1693 = vmatpush1.msra.mxu0 %v249
    %1694 = vmatprep.subr.mxu0 %v254
    %1695 = vmatpush1.msra.mxu0 %v253
    %1696 = vmatprep.subr.mxu0 %v258
    %1697 = vmatpush1.msra.mxu0 %v257
    %1698 = vmatprep.subr.mxu0 %v262
    %1699 = vmatpush1.msra.mxu0 %v261
    %1700 = vmatprep.subr.mxu0 %v266
    %1701 = vmatpush1.msra.mxu0 %v265
    %1702 = vmatprep.subr.mxu0 %v270
    %1703 = vmatpush1.msra.mxu0 %v269
    %1704 = vmatprep.subr.mxu0 %v274
    %1705 = vmatpush1.msra.mxu0 %v273
    %1706 = vmatprep.subr.mxu0 %v278
    %1707 = vmatpush1.msra.mxu0 %v277
    %1708 = vmatprep.subr.mxu0 %v282
    %1709 = vmatpush1.msra.mxu0 %v281
    %1710 = vmatprep.subr.mxu0 %v286
    %1711 = vmatpush1.msra.mxu0 %v285
    %1712 = vmatprep.subr.mxu0 %v290
    %1713 = vmatpush1.msra.mxu0 %v289
    %1714 = vmatprep.subr.mxu0 %v294
    %1715 = vmatpush1.msra.mxu0 %v293
    %1716 = vmatprep.subr.mxu0 %v298
    %1717 = vmatpush1.msra.mxu0 %v297
    %1718 = vmatprep.subr.mxu0 %v302
    %1719 = vmatpush1.msra.mxu0 %v301
    %1720 = vmatprep.subr.mxu0 %v306
    %1721 = vmatpush1.msra.mxu0 %v305
    %1722 = vmatprep.subr.mxu0 %v310
    %1723 = vmatpush1.msra.mxu0 %v309
    %1724 = vmatprep.subr.mxu0 0.0
    %1725 = vmatpush1.msra.mxu0 0.0
    %1726 = vmatprep.subr.mxu0 0.0
    %1727 = vmatpush1.msra.mxu0 0.0
    %1728 = vmatprep.subr.mxu0 0.0
    %1729 = vmatpush1.msra.mxu0 0.0
    %1730 = vmatprep.subr.mxu0 0.0
    %1731 = vmatpush1.msra.mxu0 0.0
    %1732 = vmatprep.subr.mxu0 0.0
    %1733 = vmatpush1.msra.mxu0 0.0
    %1734 = vmatprep.subr.mxu0 0.0
    %1735 = vmatpush1.msra.mxu0 0.0
    %1736 = vmatprep.subr.mxu0 0.0
    %1737 = vmatpush1.msra.mxu0 0.0
    %1738 = vmatprep.subr.mxu0 0.0
    %1739 = vmatpush1.msra.mxu0 0.0
    %1740 = vmatprep.subr.mxu0 0.0
    %1741 = vmatpush1.msra.mxu0 0.0
    %1742 = vmatprep.subr.mxu0 0.0
    %1743 = vmatpush1.msra.mxu0 0.0
    %1744 = vmatprep.subr.mxu0 0.0
    %1745 = vmatpush1.msra.mxu0 0.0
    %1746 = vmatprep.subr.mxu0 0.0
    %1747 = vmatpush1.msra.mxu0 0.0
    %1748 = vmatprep.subr.mxu0 0.0
    %1749 = vmatpush1.msra.mxu0 0.0
    %1750 = vmatprep.subr.mxu0 0.0
    %1751 = vmatpush1.msra.mxu0 0.0
    %1752 = vmatprep.subr.mxu0 0.0
    %1753 = vmatpush1.msra.mxu0 0.0
    %1754 = vmatprep.subr.mxu0 0.0
    %1755 = vmatpush1.msra.mxu0 0.0
    %1756 = vmatprep.mubr.f32.mxu0 0.0
    %1757 = vmatmul.mubr.f32.gmra.mrb[0].mxu0 %v1620
    %v1758 = vpop.f32.mrb[0].mxu0
    %v1759 = vadd.f32 0.0, %v1758
    %v1760 = vpop.f32.mrb[0].mxu0
    %v1761 = vadd.f32 0.0, %v1760
    %1762 = vdwg.mxu0
    %v1763 = vadd.f32 %v1759, %v316
    %v1764 = vadd.f32 %v1761, %v320
    %v1765 = vxor.u32 %v1763, 2147483648
    %v1766 = vxor.u32 %v1764, 2147483648
    %v1767 = vmul.f32 %v1765, 1.442695
    %v1768 = vpow.pop %v1767
    %v1769 = vmul.f32 %v1766, 1.442695
    %v1770 = vpow.pop %v1769
    %v1771 = vadd.f32 %v1768, 1.0
    %v1772 = vadd.f32 %v1770, 1.0
    %v1773 = vrcp.pop %v1771
    %v1774 = vmul.f32 1.0, %v1773
    %v1775 = vrcp.pop %v1772
    %v1776 = vmul.f32 1.0, %v1775
    %v1777 = vtanh.pop %v1764
    %v1778 = vmul.f32 %v1774, %v1577
    %1780 = vrot.lane.b32.xlu0 %v1777, 64
    %v1781 = vpop.permute.xlu0 %1780
    %v1783 = vmul.f32 %v1774, %v1781
    %1785 = vrot.lane.b32.xlu0 %v1783, 64
    %v1786 = vpop.permute.xlu0 %1785
    %v1788 = vadd.f32 %v1778, %v1786
    %v1789 = vtanh.pop %v1788
    %1791 = vrot.lane.b32.xlu0 %v1789, 64
    %v1792 = vpop.permute.xlu0 %1791
    %v1794 = vmul.f32 %v1776, %v1792
    %v1795 = vadd.f32 %v243, %v1688
    %v1796 = vadd.f32 %v245, %v1690
    %v1797 = vxor.u32 %v1795, 2147483648
    %v1798 = vxor.u32 %v1796, 2147483648
    %v1799 = vmul.f32 %v1797, 1.442695
    %v1800 = vpow.pop %v1799
    %v1801 = vmul.f32 %v1798, 1.442695
    %v1802 = vpow.pop %v1801
    %v1803 = vadd.f32 %v1800, 1.0
    %v1804 = vadd.f32 %v1802, 1.0
    %v1805 = vrcp.pop %v1803
    %v1806 = vmul.f32 1.0, %v1805
    %v1807 = vrcp.pop %v1804
    %v1808 = vmul.f32 1.0, %v1807
    %v1809 = vtanh.pop %v1796
    %v1810 = vmul.f32 %v1806, %v1609
    %1812 = vrot.lane.b32.xlu0 %v1809, 64
    %v1813 = vpop.permute.xlu0 %1812
    %v1815 = vmul.f32 %v1806, %v1813
    %1817 = vrot.lane.b32.xlu0 %v1815, 64
    %v1818 = vpop.permute.xlu0 %1817
    %v1820 = vadd.f32 %v1810, %v1818
    %v1821 = vtanh.pop %v1820
    %1823 = vrot.lane.b32.xlu0 %v1821, 64
    %v1824 = vpop.permute.xlu0 %1823
    %v1826 = vmul.f32 %v1808, %v1824
    %1828 = vrot.lane.b32.xlu0 %v1794, 64
    %v1829 = vpop.permute.xlu0 %1828
    %v1831 = vsel %vm353, %v1826, %v1829
    %1832 = vmatprep.subr.mxu0 %v250
    %1833 = vmatpush1.msra.mxu0 %v249
    %1834 = vmatprep.subr.mxu0 %v254
    %1835 = vmatpush1.msra.mxu0 %v253
    %1836 = vmatprep.subr.mxu0 %v258
    %1837 = vmatpush1.msra.mxu0 %v257
    %1838 = vmatprep.subr.mxu0 %v262
    %1839 = vmatpush1.msra.mxu0 %v261
    %1840 = vmatprep.subr.mxu0 %v266
    %1841 = vmatpush1.msra.mxu0 %v265
    %1842 = vmatprep.subr.mxu0 %v270
    %1843 = vmatpush1.msra.mxu0 %v269
    %1844 = vmatprep.subr.mxu0 %v274
    %1845 = vmatpush1.msra.mxu0 %v273
    %1846 = vmatprep.subr.mxu0 %v278
    %1847 = vmatpush1.msra.mxu0 %v277
    %1848 = vmatprep.subr.mxu0 %v282
    %1849 = vmatpush1.msra.mxu0 %v281
    %1850 = vmatprep.subr.mxu0 %v286
    %1851 = vmatpush1.msra.mxu0 %v285
    %1852 = vmatprep.subr.mxu0 %v290
    %1853 = vmatpush1.msra.mxu0 %v289
    %1854 = vmatprep.subr.mxu0 %v294
    %1855 = vmatpush1.msra.mxu0 %v293
    %1856 = vmatprep.subr.mxu0 %v298
    %1857 = vmatpush1.msra.mxu0 %v297
    %1858 = vmatprep.subr.mxu0 %v302
    %1859 = vmatpush1.msra.mxu0 %v301
    %1860 = vmatprep.subr.mxu0 %v306
    %1861 = vmatpush1.msra.mxu0 %v305
    %1862 = vmatprep.subr.mxu0 %v310
    %1863 = vmatpush1.msra.mxu0 %v309
    %1864 = vmatprep.subr.mxu0 0.0
    %1865 = vmatpush1.msra.mxu0 0.0
    %1866 = vmatprep.subr.mxu0 0.0
    %1867 = vmatpush1.msra.mxu0 0.0
    %1868 = vmatprep.subr.mxu0 0.0
    %1869 = vmatpush1.msra.mxu0 0.0
    %1870 = vmatprep.subr.mxu0 0.0
    %1871 = vmatpush1.msra.mxu0 0.0
    %1872 = vmatprep.subr.mxu0 0.0
    %1873 = vmatpush1.msra.mxu0 0.0
    %1874 = vmatprep.subr.mxu0 0.0
    %1875 = vmatpush1.msra.mxu0 0.0
    %1876 = vmatprep.subr.mxu0 0.0
    %1877 = vmatpush1.msra.mxu0 0.0
    %1878 = vmatprep.subr.mxu0 0.0
    %1879 = vmatpush1.msra.mxu0 0.0
    %1880 = vmatprep.subr.mxu0 0.0
    %1881 = vmatpush1.msra.mxu0 0.0
    %1882 = vmatprep.subr.mxu0 0.0
    %1883 = vmatpush1.msra.mxu0 0.0
    %1884 = vmatprep.subr.mxu0 0.0
    %1885 = vmatpush1.msra.mxu0 0.0
    %1886 = vmatprep.subr.mxu0 0.0
    %1887 = vmatpush1.msra.mxu0 0.0
    %1888 = vmatprep.subr.mxu0 0.0
    %1889 = vmatpush1.msra.mxu0 0.0
    %1890 = vmatprep.subr.mxu0 0.0
    %1891 = vmatpush1.msra.mxu0 0.0
    %1892 = vmatprep.subr.mxu0 0.0
    %1893 = vmatpush1.msra.mxu0 0.0
    %1894 = vmatprep.subr.mxu0 0.0
    %1895 = vmatpush1.msra.mxu0 0.0
    %1896 = vmatprep.mubr.f32.mxu0 0.0
    %1897 = vmatmul.mubr.f32.gmra.mrb[0].mxu0 %v1831
    %v1898 = vpop.f32.mrb[0].mxu0
    %v1899 = vadd.f32 0.0, %v1898
    %v1900 = vpop.f32.mrb[0].mxu0
    %v1901 = vadd.f32 0.0, %v1900
    %1902 = vdwg.mxu0
    %v1903 = vadd.f32 %v1899, %v316
    %v1904 = vadd.f32 %v1901, %v320
    %v1905 = vxor.u32 %v1903, 2147483648
    %v1906 = vxor.u32 %v1904, 2147483648
    %v1907 = vmul.f32 %v1905, 1.442695
    %v1908 = vpow.pop %v1907
    %v1909 = vmul.f32 %v1906, 1.442695
    %v1910 = vpow.pop %v1909
    %v1911 = vadd.f32 %v1908, 1.0
    %v1912 = vadd.f32 %v1910, 1.0
    %v1913 = vrcp.pop %v1911
    %v1914 = vmul.f32 1.0, %v1913
    %v1915 = vrcp.pop %v1912
    %v1916 = vmul.f32 1.0, %v1915
    %v1917 = vtanh.pop %v1904
    %v1918 = vmul.f32 %v1914, %v1788
    %1920 = vrot.lane.b32.xlu0 %v1917, 64
    %v1921 = vpop.permute.xlu0 %1920
    %v1923 = vmul.f32 %v1914, %v1921
    %1925 = vrot.lane.b32.xlu0 %v1923, 64
    %v1926 = vpop.permute.xlu0 %1925
    %v1928 = vadd.f32 %v1918, %v1926
    %v1929 = vtanh.pop %v1928
    %1931 = vrot.lane.b32.xlu0 %v1929, 64
    %v1932 = vpop.permute.xlu0 %1931
    %v1934 = vmul.f32 %v1916, %v1932
    %v1935 = vld [vmem:[#allocation8] sm:$0xff]
    %v1936 = vld [vmem:[#allocation8 + $0x8] sm:$0xff]
    %v1937 = vld [vmem:[#allocation8 + $0x10] sm:$0xff]
    %v1938 = vld [vmem:[#allocation8 + $0x18] sm:$0xff]
    %v1939 = vld [vmem:[#allocation8 + $0x20] sm:$0xff]
    %v1940 = vld [vmem:[#allocation8 + $0x28] sm:$0xff]
    %v1941 = vld [vmem:[#allocation8 + $0x30] sm:$0xff]
    %v1942 = vld [vmem:[#allocation8 + $0x38] sm:$0xff]
    %v1943 = vld [vmem:[%s6] sm:$0x1]
    %v1945 = vlaneseq
    %v1946 = vshrl.u32 %v1945, 7
    %v1947 = vsub.s32 0, %v1946
    %v1948 = vrot.slane %v1943, %v1947
    %v1951 = vsel %vm353, %v1934, 0
    %1953 = vmatprep.subr.mxu0 0.0
    %1954 = vmatpush1.msra.mxu0 %v1935
    %1955 = vmatprep.subr.mxu0 0.0
    %1956 = vmatpush1.msra.mxu0 %v1936
    %1957 = vmatprep.subr.mxu0 0.0
    %1958 = vmatpush1.msra.mxu0 %v1937
    %1959 = vmatprep.subr.mxu0 0.0
    %1960 = vmatpush1.msra.mxu0 %v1938
    %1961 = vmatprep.subr.mxu0 0.0
    %1962 = vmatpush1.msra.mxu0 %v1939
    %1963 = vmatprep.subr.mxu0 0.0
    %1964 = vmatpush1.msra.mxu0 %v1940
    %1965 = vmatprep.subr.mxu0 0.0
    %1966 = vmatpush1.msra.mxu0 %v1941
    %1967 = vmatprep.subr.mxu0 0.0
    %1968 = vmatpush1.msra.mxu0 %v1942
    %1969 = vmatprep.subr.mxu0 0.0
    %1970 = vmatpush1.msra.mxu0 0.0
    %1971 = vmatprep.subr.mxu0 0.0
    %1972 = vmatpush1.msra.mxu0 0.0
    %1973 = vmatprep.subr.mxu0 0.0
    %1974 = vmatpush1.msra.mxu0 0.0
    %1975 = vmatprep.subr.mxu0 0.0
    %1976 = vmatpush1.msra.mxu0 0.0
    %1977 = vmatprep.subr.mxu0 0.0
    %1978 = vmatpush1.msra.mxu0 0.0
    %1979 = vmatprep.subr.mxu0 0.0
    %1980 = vmatpush1.msra.mxu0 0.0
    %1981 = vmatprep.subr.mxu0 0.0
    %1982 = vmatpush1.msra.mxu0 0.0
    %1983 = vmatprep.subr.mxu0 0.0
    %1984 = vmatpush1.msra.mxu0 0.0
    %1985 = vmatprep.subr.mxu0 0.0
    %1986 = vmatpush1.msra.mxu0 0.0
    %1987 = vmatprep.subr.mxu0 0.0
    %1988 = vmatpush1.msra.mxu0 0.0
    %1989 = vmatprep.subr.mxu0 0.0
    %1990 = vmatpush1.msra.mxu0 0.0
    %1991 = vmatprep.subr.mxu0 0.0
    %1992 = vmatpush1.msra.mxu0 0.0
    %1993 = vmatprep.subr.mxu0 0.0
    %1994 = vmatpush1.msra.mxu0 0.0
    %1995 = vmatprep.subr.mxu0 0.0
    %1996 = vmatpush1.msra.mxu0 0.0
    %1997 = vmatprep.subr.mxu0 0.0
    %1998 = vmatpush1.msra.mxu0 0.0
    %1999 = vmatprep.subr.mxu0 0.0
    %2000 = vmatpush1.msra.mxu0 0.0
    %2001 = vmatprep.subr.mxu0 0.0
    %2002 = vmatpush1.msra.mxu0 0.0
    %2003 = vmatprep.subr.mxu0 0.0
    %2004 = vmatpush1.msra.mxu0 0.0
    %2005 = vmatprep.subr.mxu0 0.0
    %2006 = vmatpush1.msra.mxu0 0.0
    %2007 = vmatprep.subr.mxu0 0.0
    %2008 = vmatpush1.msra.mxu0 0.0
    %2009 = vmatprep.subr.mxu0 0.0
    %2010 = vmatpush1.msra.mxu0 0.0
    %2011 = vmatprep.subr.mxu0 0.0
    %2012 = vmatpush1.msra.mxu0 0.0
    %2013 = vmatprep.subr.mxu0 0.0
    %2014 = vmatpush1.msra.mxu0 0.0
    %2015 = vmatprep.subr.mxu0 0.0
    %2016 = vmatpush1.msra.mxu0 0.0
    %2017 = vmatprep.mubr.f32.mxu0 0.0
    %2018 = vmatmul.mubr.f32.gmra.mrb[0].mxu0 %v1951
    %v2019 = vpop.f32.mrb[0].mxu0
    %v2020 = vadd.f32 %v1948, %v2019
    %v2021 = vpop.f32.mrb[0].mxu0
    %2022 = vdwg.mxu0
    %2023 = vst [vmem:[#allocation10] sm:$0xff] %v2020
    // Predicated region
    $region46: #{tpu_custom_call.1} parent=1 // pred_check
      _
    $region47: #{tpu_custom_call.1} parent=1 // pred_check_branch
      %2025 = sbr.rel (0) target = $region49
    $region48: #{tpu_custom_call.1} parent=1 // pred_region
      %s2027 = ssub.s32 128, 128
      %2028 = vsyncadd [#allocation4], %s2027
      %s2030 = sshll.u32 [#allocation10], 4
      %s2031 = int_to_ptr.vmem [resolvable:$true] %s2030
      %2033 = dma.vmem_to_hbm [thread:$0]  %s2031, 128, %s7, [#allocation4]
    $region49: #{tpu_custom_call.1} parent=1 // pred_fallthru
      _
    // Predicated region
    $region50: #{tpu_custom_call.1} parent=1 // pred_check
      _
    $region51: #{tpu_custom_call.1} parent=1 // pred_check_branch
      %2035 = sbr.rel (0) target = $region53
    $region52: #{tpu_custom_call.1} parent=1 // pred_region
      %2036 = dma.done [#allocation4], 128
    $region53: #{tpu_custom_call.1} parent=1 // pred_fallthru
      _
    %2037 = vsyncpa [#allocation3], 1
    %2038 = vsyncpa [#allocation6], 1
    %2039 = vsyncpa [#allocation9], 1
    %2040 = vsyncpa [#allocation4], 1

</llo_original>
